<compile_context>
chip_gen: v6e
topology: v6e:2x2x1
jax: 0.10.0
libtpu: 0.0.40
codegen_flags: <defaults>
</compile_context>

<pallas_src>
import functools
import math

import jax
import jax.numpy as jnp
from jax.experimental import pallas as pl
from jax.experimental.pallas import tpu as pltpu

LN_EPS = 1e-5


def _layernorm(x, w, b):
    mu = jnp.mean(x, axis=-1, keepdims=True)
    var = jnp.mean(jnp.square(x - mu), axis=-1, keepdims=True)
    return (x - mu) * jax.lax.rsqrt(var + LN_EPS) * w + b


def _gelu_exact(x):
    # torch.nn.functional.gelu default (erf-based, exact)
    return 0.5 * x * (1.0 + jax.lax.erf(x * (1.0 / math.sqrt(2.0))))


def _prod(shape):
    n = 1
    for d in shape:
        n *= int(d)
    return n


def fused_transformer_kernel(
        x_ref, ln1w_ref, ln1b_ref, wqkv_ref, wproj_ref, bproj_ref,
        ln2w_ref, ln2b_ref, w1_ref, b1_ref, w2_ref, b2_ref,
        fnw_ref, fnb_ref, fcw_ref, fcb_ref,
        out_ref, x_scr,
        *, num_heads, head_dim, n_valid, tb, n_pad, compute_dtype):
    """Grid = (B // TB, L).  One step = one encoder layer for TB batch elems."""
    layer = pl.program_id(1)
    n_layers = pl.num_programs(1)
    scale = head_dim ** -0.5
    c_dim = num_heads * head_dim
    rows = tb * n_pad

    # Load the TB stacked (padded) token blocks into the resident f32 scratch
    # at layer 0; all matmuls below run on the flattened (rows, C) slab.
    @pl.when(layer == 0)
    def _():
        x_scr[...] = x_ref[...].reshape(rows, c_dim).astype(jnp.float32)

    x = x_scr[...]                                        # (rows, C) f32

    # ---------------- attention branch ----------------
    h = _layernorm(x, ln1w_ref[0], ln1b_ref[0])
    qkv = jnp.dot(h.astype(compute_dtype), wqkv_ref[0],
                  preferred_element_type=jnp.float32)     # (rows, 3C) f32
    # Sublane-only reshape (n_pad is a multiple of 8) for the per-(b, head)
    # score / softmax / context step.
    qkv3 = qkv.reshape(tb, n_pad, 3 * c_dim).astype(compute_dtype)

    # Mask padded key positions (columns >= n_valid) before softmax, every
    # layer, so padded rows never contaminate valid rows.
    col_ids = jax.lax.broadcasted_iota(jnp.int32, (1, 1, n_pad), 2)
    key_mask = jnp.where(col_ids < n_valid, 0.0, -1e30).astype(jnp.float32)

    attn = None
    for hh in range(num_heads):          # small static loop over heads
        lo = hh * head_dim
        q = qkv3[:, :, lo:lo + head_dim]                          # (tb,Np,hd)
        k = qkv3[:, :, c_dim + lo:c_dim + lo + head_dim]
        v = qkv3[:, :, 2 * c_dim + lo:2 * c_dim + lo + head_dim]
        s = jnp.einsum('bnd,bmd->bnm', q, k,
                       preferred_element_type=jnp.float32) * scale
        s = s + key_mask
        s = s - jnp.max(s, axis=-1, keepdims=True)
        p = jnp.exp(s)
        p = p * pl.reciprocal(jnp.sum(p, axis=-1, keepdims=True), approx=True)
        ctx = jnp.einsum('bnm,bmd->bnd', p.astype(compute_dtype), v,
                         preferred_element_type=jnp.float32)      # (tb,Np,hd)
        # Accumulate the output projection per head through a sublane slice of
        # wproj (no lane-axis concatenation of head contexts).
        part = jnp.dot(ctx.reshape(rows, head_dim).astype(compute_dtype),
                       wproj_ref[0, lo:lo + head_dim, :],
                       preferred_element_type=jnp.float32)        # (rows, C)
        attn = part if attn is None else attn + part
    x = x + attn + bproj_ref[0]

    # ---------------- MLP branch ----------------
    h2 = _layernorm(x, ln2w_ref[0], ln2b_ref[0])
    z = jnp.dot(h2.astype(compute_dtype), w1_ref[0],
                preferred_element_type=jnp.float32) + b1_ref[0]
    z = _gelu_exact(z)
    z = jnp.dot(z.astype(compute_dtype), w2_ref[0],
                preferred_element_type=jnp.float32) + b2_ref[0]
    x = x + z

    x_scr[...] = x                                        # carry to next layer

    # ---------------- classifier head (last layer only) ----------------
    @pl.when(layer == n_layers - 1)
    def _():
        cls_tok = x.reshape(tb, n_pad, c_dim)[:, 0, :]    # (tb, C); LN per-token
        hc = _layernorm(cls_tok, fnw_ref[...], fnb_ref[...])
        logits = jnp.dot(hc, fcw_ref[...],
                         preferred_element_type=jnp.float32) + fcb_ref[...]
        out_ref[...] = logits.reshape(tb, 1, -1).astype(out_ref.dtype)


def _choose_tb(batch, n_pad, c_dim, f_dim, n_cls, w_itemsize, vmem_cap):
    """Pick how many batch elements to stack per grid step.

    Larger TB amortizes the per-layer weight DMA over more matmul rows (the
    kernel is weight-streaming bound otherwise) while staying inside the
    per-generation VMEM budget; keep >=2 grid steps on the (parallel) batch
    axis when that costs at most a 2x reduction in stacked rows (v7x has 2
    TensorCores).
    """
    budget = int(vmem_cap * 0.80)
    divisors = [d for d in range(1, batch + 1) if batch % d == 0]

    def footprint(tb):
        rows = tb * n_pad
        # double-buffered bf16 weight slabs (qkv, proj, mlp1, mlp2)
        w = 2 * w_itemsize * (3 * c_dim * c_dim + c_dim * c_dim
                              + 2 * c_dim * f_dim)
        # per-layer vectors + head params (double-buffered, f32)
        small = 2 * 4 * (8 * c_dim + 2 * f_dim + c_dim * n_cls + 2 * n_cls)
        # activations: token block (x2), resident scratch, qkv / mlp hidden /
        # residual temporaries, attention scores+probs for one head
        act = 4 * (3 * rows * c_dim + rows * (3 * c_dim + f_dim + 2 * c_dim)
                   + 2 * tb * n_pad * n_pad)
        return w + small + act

    best = 1
    for d in divisors:
        rows = d * n_pad
        if rows > 1024 or footprint(d) > budget:
            break
        best = d
        if rows >= 256:                 # MXU-native M reached; stop growing
            break
    if batch // best < 2:
        for d in reversed(divisors):
            if d < best and batch // d >= 2 and 2 * d >= best:
                best = d
                break
    return best


def transformer_classifier(x, params, *, num_heads):
    """x: (B, sequence_length, C) float32 tokens.  Returns (B, num_classes)."""
    B, seq, C = x.shape
    compute_dtype = params['wqkv'].dtype
    L = params['wqkv'].shape[0]
    F = params['w1'].shape[-1]
    ncls = params['fc_w'].shape[-1]
    head_dim = C // num_heads

    # ---- glue (plain JAX): cls token, positional embedding, pad sequence ----
    cls = jnp.broadcast_to(params['class_emb'], (B, 1, C))
    tok = jnp.concatenate([cls, x], axis=1) + params['pos_emb']   # (B, N, C)
    N = seq + 1
    Np = max(8, ((N + 7) // 8) * 8)                  # sublane-dense sequence
    if Np > N:
        tok = jnp.pad(tok, ((0, 0), (0, Np - N), (0, 0)))
    tok = tok.astype(jnp.float32)
    # Dropout / attention dropout / DropPath are identities in eval mode.

    try:
        vmem_cap = int(pltpu.get_tpu_info().vmem_capacity_bytes)
    except Exception:
        vmem_cap = 64 * 1024 * 1024                  # conservative (v7x per-TC)

    TB = _choose_tb(B, Np, C, F, ncls, jnp.dtype(compute_dtype).itemsize,
                    vmem_cap)
    GB = B // TB
    rows = TB * Np

    kernel = functools.partial(
        fused_transformer_kernel, num_heads=num_heads, head_dim=head_dim,
        n_valid=N, tb=TB, n_pad=Np, compute_dtype=compute_dtype)

    def batch_map(b, l):
        return (b, 0, 0)

    def layer_map(b, l):
        return (l, 0, 0)

    def const2(b, l):
        return (0, 0)

    in_specs = [
        pl.BlockSpec((TB, Np, C), batch_map),            # tokens (TB stacked)
        pl.BlockSpec((1, 1, C), layer_map),              # ln1_w
        pl.BlockSpec((1, 1, C), layer_map),              # ln1_b
        pl.BlockSpec((1, C, 3 * C), layer_map),          # wqkv (bf16)
        pl.BlockSpec((1, C, C), layer_map),              # wproj (bf16)
        pl.BlockSpec((1, 1, C), layer_map),              # bproj
        pl.BlockSpec((1, 1, C), layer_map),              # ln2_w
        pl.BlockSpec((1, 1, C), layer_map),              # ln2_b
        pl.BlockSpec((1, C, F), layer_map),              # w1 (bf16)
        pl.BlockSpec((1, 1, F), layer_map),              # b1
        pl.BlockSpec((1, F, C), layer_map),              # w2 (bf16)
        pl.BlockSpec((1, 1, C), layer_map),              # b2
        pl.BlockSpec((1, C), const2),                    # final norm w
        pl.BlockSpec((1, C), const2),                    # final norm b
        pl.BlockSpec((C, ncls), const2),                 # fc w
        pl.BlockSpec((1, ncls), const2),                 # fc b
    ]
    args = (tok, params['ln1_w'], params['ln1_b'], params['wqkv'],
            params['wproj'], params['bproj'], params['ln2_w'], params['ln2_b'],
            params['w1'], params['b1'], params['w2'], params['b2'],
            params['norm_w'], params['norm_b'], params['fc_w'], params['fc_b'])

    # VMEM budget: double-buffered pipelined blocks + resident scratch +
    # in-kernel temporaries; always set, capped at 85% of the physical
    # per-core VMEM (64 MiB on v7x, 128 MiB on v5e/v6e), floor 32 MiB.
    est = 0
    for spec, a in zip(in_specs, args):
        est += 2 * _prod(spec.block_shape) * jnp.dtype(a.dtype).itemsize
    est += 2 * TB * ncls * 4                          # output block
    est += rows * C * 4                               # resident activation scratch
    est += rows * (3 * C + F + 2 * C) * 4             # qkv / mlp hidden / temps
    est += 2 * TB * Np * Np * 4                       # scores + probs (one head)
    vmem_limit = int(min(vmem_cap * 0.85,
                         max(int(est * 1.25), 32 * 1024 * 1024)))
    # TODO(synk): very large C/F on v7x (64 MiB VMEM) should stream the MLP F
    #             dimension (extra grid axis / emit_pipeline) and could store
    #             the weight slabs in fp8 to halve HBM traffic and VMEM.
    # TODO(synk): on v5e/v6e (128 MiB VMEM) pl.Buffered(3) on the wqkv/w1/w2
    #             specs could hide exposed weight DMA at small TB; left at the
    #             default depth to keep a single portable code path.

    logits = pl.pallas_call(
        kernel,
        out_shape=jax.ShapeDtypeStruct((B, 1, ncls), jnp.float32),
        grid=(GB, L),
        in_specs=in_specs,
        out_specs=pl.BlockSpec((TB, 1, ncls), lambda b, l: (b, 0, 0)),
        scratch_shapes=[pltpu.VMEM((rows, C), jnp.float32)],
        compiler_params=pltpu.CompilerParams(
            dimension_semantics=("parallel", "arbitrary"),
            vmem_limit_bytes=vmem_limit),
    )(*args)
    return logits[:, 0, :]


def _trunc_normal(key, shape, std):
    return std * jax.random.truncated_normal(key, -2.0, 2.0, shape, jnp.float32)


def init_params(key, *, embedding_dim, num_layers, num_heads, mlp_ratio,
                num_classes, sequence_length, compute_dtype=jnp.bfloat16):
    C = embedding_dim
    F = int(C * mlp_ratio)
    n_seq = sequence_length + 1          # +1 for cls token (gramian=False)

    keys = jax.random.split(key, num_layers * 4 + 2)
    k_pos, k_fc = keys[0], keys[1]
    layer_keys = keys[2:]

    wqkv_l, wproj_l, w1_l, w2_l = [], [], [], []
    for i in range(num_layers):
        kq, kp_, k1, k2 = layer_keys[i * 4:(i + 1) * 4]
        # PyTorch layouts: qkv.weight (3C, C), proj.weight (C, C),
        # linear1.weight (F, C), linear2.weight (C, F); y = x @ W.T
        wqkv_l.append(_trunc_normal(kq, (3 * C, C), 0.02).T)   # (C, 3C)
        wproj_l.append(_trunc_normal(kp_, (C, C), 0.02).T)     # (C, C)
        w1_l.append(_trunc_normal(k1, (F, C), 0.02).T)         # (C, F)
        w2_l.append(_trunc_normal(k2, (C, F), 0.02).T)         # (F, C)

    params = {
        # class token is zero-initialized in the PyTorch module
        'class_emb': jnp.zeros((1, 1, C), jnp.float32),
        # learnable positional embedding, trunc_normal(std=0.2)
        'pos_emb': _trunc_normal(k_pos, (1, n_seq, C), 0.2),
        # stacked per-layer params (leading L axis, lane-dense matrices)
        'ln1_w': jnp.ones((num_layers, 1, C), jnp.float32),
        'ln1_b': jnp.zeros((num_layers, 1, C), jnp.float32),
        'ln2_w': jnp.ones((num_layers, 1, C), jnp.float32),
        'ln2_b': jnp.zeros((num_layers, 1, C), jnp.float32),
        'wqkv': jnp.stack(wqkv_l).astype(compute_dtype),       # (L, C, 3C)
        'wproj': jnp.stack(wproj_l).astype(compute_dtype),     # (L, C, C)
        'bproj': jnp.zeros((num_layers, 1, C), jnp.float32),
        'w1': jnp.stack(w1_l).astype(compute_dtype),           # (L, C, F)
        'b1': jnp.zeros((num_layers, 1, F), jnp.float32),
        'w2': jnp.stack(w2_l).astype(compute_dtype),           # (L, F, C)
        'b2': jnp.zeros((num_layers, 1, C), jnp.float32),
        # final LayerNorm (w=1, b=0) and fc (trunc_normal 0.02, b=0) kept f32
        'norm_w': jnp.ones((1, C), jnp.float32),
        'norm_b': jnp.zeros((1, C), jnp.float32),
        'fc_w': _trunc_normal(k_fc, (num_classes, C), 0.02).T,  # (C, ncls)
        'fc_b': jnp.zeros((1, num_classes), jnp.float32),
    }
    return params


if __name__ == "__main__":
    # Small shapes consistent with the module's forward:
    # x: (batch, sequence_length, embedding_dim)
    B, seq, C = 2, 8, 32
    num_heads, num_layers, mlp_ratio, num_classes = 4, 2, 2.0, 10

    key = jax.random.PRNGKey(0)
    kx, kp = jax.random.split(key)
    x = jax.random.normal(kx, (B, seq, C), jnp.float32)
    params = init_params(kp, embedding_dim=C, num_layers=num_layers,
                         num_heads=num_heads, mlp_ratio=mlp_ratio,
                         num_classes=num_classes, sequence_length=seq)

    fwd = jax.jit(functools.partial(transformer_classifier, num_heads=num_heads))
    out = jax.block_until_ready(fwd(x, params))
    assert out.shape == (B, num_classes)
    assert bool(jnp.all(jnp.isfinite(out)))
    print("KERNEL_OK")
</pallas_src>

<mosaic_0001>
module attributes {stable_mosaic.version = 11 : i64} {
  func.func @fused_transformer_kernel(%arg0: i32, %arg1: i32, %arg2: memref<1x16x32xf32, #tpu.memory_space<vmem>>, %arg3: memref<1x1x32xf32, #tpu.memory_space<vmem>>, %arg4: memref<1x1x32xf32, #tpu.memory_space<vmem>>, %arg5: memref<1x32x96xbf16, #tpu.memory_space<vmem>>, %arg6: memref<1x32x32xbf16, #tpu.memory_space<vmem>>, %arg7: memref<1x1x32xf32, #tpu.memory_space<vmem>>, %arg8: memref<1x1x32xf32, #tpu.memory_space<vmem>>, %arg9: memref<1x1x32xf32, #tpu.memory_space<vmem>>, %arg10: memref<1x32x64xbf16, #tpu.memory_space<vmem>>, %arg11: memref<1x1x64xf32, #tpu.memory_space<vmem>>, %arg12: memref<1x64x32xbf16, #tpu.memory_space<vmem>>, %arg13: memref<1x1x32xf32, #tpu.memory_space<vmem>>, %arg14: memref<1x32xf32, #tpu.memory_space<vmem>>, %arg15: memref<1x32xf32, #tpu.memory_space<vmem>>, %arg16: memref<32x10xf32, #tpu.memory_space<vmem>>, %arg17: memref<1x10xf32, #tpu.memory_space<vmem>>, %arg18: memref<1x1x10xf32, #tpu.memory_space<vmem>>, %arg19: memref<16x32xf32, #tpu.memory_space<vmem>>) attributes {dimension_semantics = [#tpu.dimension_semantics<parallel>, #tpu.dimension_semantics<arbitrary>], iteration_bounds = array<i64: 2, 2>, scalar_prefetch = 0 : i64, scratch_operands = 1 : i64, tpu.core_type = #tpu.core_type<tc>, window_params = [{transform_indices = @transform_0, window_bounds = array<i64: 1, 16, 32>}, {transform_indices = @transform_1, window_bounds = array<i64: 1, 1, 32>}, {transform_indices = @transform_2, window_bounds = array<i64: 1, 1, 32>}, {transform_indices = @transform_3, window_bounds = array<i64: 1, 32, 96>}, {transform_indices = @transform_4, window_bounds = array<i64: 1, 32, 32>}, {transform_indices = @transform_5, window_bounds = array<i64: 1, 1, 32>}, {transform_indices = @transform_6, window_bounds = array<i64: 1, 1, 32>}, {transform_indices = @transform_7, window_bounds = array<i64: 1, 1, 32>}, {transform_indices = @transform_8, window_bounds = array<i64: 1, 32, 64>}, {transform_indices = @transform_9, window_bounds = array<i64: 1, 1, 64>}, {transform_indices = @transform_10, window_bounds = array<i64: 1, 64, 32>}, {transform_indices = @transform_11, window_bounds = array<i64: 1, 1, 32>}, {pipeline_mode = #tpu.pipeline_mode<synchronous>, transform_indices = @transform_12, window_bounds = array<i64: 1, 32>}, {pipeline_mode = #tpu.pipeline_mode<synchronous>, transform_indices = @transform_13, window_bounds = array<i64: 1, 32>}, {pipeline_mode = #tpu.pipeline_mode<synchronous>, transform_indices = @transform_14, window_bounds = array<i64: 32, 10>}, {pipeline_mode = #tpu.pipeline_mode<synchronous>, transform_indices = @transform_15, window_bounds = array<i64: 1, 10>}, {transform_indices = @transform_16, window_bounds = array<i64: 1, 1, 10>}]} {
    %c0_i32 = arith.constant 0 : i32
    %0 = arith.cmpi eq, %arg1, %c0_i32 : i32
    %1 = arith.extui %0 : i1 to i32
    %c0_i32_0 = arith.constant 0 : i32
    %2 = arith.cmpi ne, %1, %c0_i32_0 : i32
    scf.if %2 {
      %c0_85 = arith.constant 0 : index
      %c0_86 = arith.constant 0 : index
      %c0_87 = arith.constant 0 : index
      %205 = vector.load %arg2[%c0_85, %c0_86, %c0_87] : memref<1x16x32xf32, #tpu.memory_space<vmem>>, vector<1x16x32xf32>
      %206 = vector.shape_cast %205 : vector<1x16x32xf32> to vector<16x32xf32>
      %c0_88 = arith.constant 0 : index
      %c0_89 = arith.constant 0 : index
      %207 = vector.load %arg19[%c0_88, %c0_89] : memref<16x32xf32, #tpu.memory_space<vmem>>, vector<16x32xf32>
      tpu.vector_store %arg19[%c0_88, %c0_89], %206 {strides = array<i32>} : memref<16x32xf32, #tpu.memory_space<vmem>>, vector<16x32xf32>,
    } else {
    }
    %c0 = arith.constant 0 : index
    %c0_1 = arith.constant 0 : index
    %3 = vector.load %arg19[%c0, %c0_1] : memref<16x32xf32, #tpu.memory_space<vmem>>, vector<16x32xf32>
    %c0_2 = arith.constant 0 : index
    %c0_3 = arith.constant 0 : index
    %c0_4 = arith.constant 0 : index
    %4 = vector.load %arg3[%c0_2, %c0_3, %c0_4] : memref<1x1x32xf32, #tpu.memory_space<vmem>>, vector<1x1x32xf32>
    %5 = vector.shape_cast %4 : vector<1x1x32xf32> to vector<1x32xf32>
    %c0_5 = arith.constant 0 : index
    %c0_6 = arith.constant 0 : index
    %c0_7 = arith.constant 0 : index
    %6 = vector.load %arg4[%c0_5, %c0_6, %c0_7] : memref<1x1x32xf32, #tpu.memory_space<vmem>>, vector<1x1x32xf32>
    %7 = vector.shape_cast %6 : vector<1x1x32xf32> to vector<1x32xf32>
    %cst = arith.constant dense<0.000000e+00> : vector<16xf32>
    %8 = vector.multi_reduction <add>, %3, %cst [1] : vector<16x32xf32> to vector<16xf32>
    %9 = vector.shape_cast %8 : vector<16xf32> to vector<16x1xf32>
    %cst_8 = arith.constant 3.200000e+01 : f32
    %10 = vector.broadcast %cst_8 : f32 to vector<16x1xf32>
    %11 = arith.divf %9, %10 : vector<16x1xf32>
    %12 = vector.broadcast %11 : vector<16x1xf32> to vector<16x32xf32>
    %13 = arith.subf %3, %12 : vector<16x32xf32>
    %14 = arith.mulf %13, %13 : vector<16x32xf32>
    %cst_9 = arith.constant dense<0.000000e+00> : vector<16xf32>
    %15 = vector.multi_reduction <add>, %14, %cst_9 [1] : vector<16x32xf32> to vector<16xf32>
    %16 = vector.shape_cast %15 : vector<16xf32> to vector<16x1xf32>
    %cst_10 = arith.constant 3.200000e+01 : f32
    %17 = vector.broadcast %cst_10 : f32 to vector<16x1xf32>
    %18 = arith.divf %16, %17 : vector<16x1xf32>
    %19 = vector.broadcast %11 : vector<16x1xf32> to vector<16x32xf32>
    %20 = arith.subf %3, %19 : vector<16x32xf32>
    %cst_11 = arith.constant 9.99999974E-6 : f32
    %21 = vector.broadcast %cst_11 : f32 to vector<16x1xf32>
    %22 = arith.addf %18, %21 : vector<16x1xf32>
    %23 = math.rsqrt %22 : vector<16x1xf32>
    %24 = vector.broadcast %23 : vector<16x1xf32> to vector<16x32xf32>
    %25 = arith.mulf %20, %24 : vector<16x32xf32>
    %26 = vector.broadcast %5 : vector<1x32xf32> to vector<16x32xf32>
    %27 = arith.mulf %25, %26 : vector<16x32xf32>
    %28 = vector.broadcast %7 : vector<1x32xf32> to vector<16x32xf32>
    %29 = arith.addf %27, %28 : vector<16x32xf32>
    %30 = arith.truncf %29 : vector<16x32xf32> to vector<16x32xbf16>
    %c0_12 = arith.constant 0 : index
    %c0_13 = arith.constant 0 : index
    %c0_14 = arith.constant 0 : index
    %31 = vector.load %arg5[%c0_12, %c0_13, %c0_14] : memref<1x32x96xbf16, #tpu.memory_space<vmem>>, vector<1x32x96xbf16>
    %32 = vector.shape_cast %31 : vector<1x32x96xbf16> to vector<32x96xbf16>
    %cst_15 = arith.constant dense<0.000000e+00> : vector<16x96xf32>
    %33 = tpu.matmul %30, %32, %cst_15 {dimension_numbers = #tpu.dot_dimension_numbers<[1], [0], [0], [1], [0, 0, 1, 1], [], []>} : vector<16x32xbf16>, vector<32x96xbf16>, vector<16x96xf32> -> vector<16x96xf32>
    %34 = vector.shape_cast %33 : vector<16x96xf32> to vector<1x16x96xf32>
    %35 = arith.truncf %34 : vector<1x16x96xf32> to vector<1x16x96xbf16>
    %36 = tpu.iota {dimensions = array<i32: 2>} : vector<1x1x16xi32>
    %c9_i32 = arith.constant 9 : i32
    %37 = vector.broadcast %c9_i32 : i32 to vector<1x1x16xi32>
    %38 = arith.cmpi slt, %36, %37 : vector<1x1x16xi32>
    %cst_16 = arith.constant 0.000000e+00 : f32
    %cst_17 = arith.constant -1.000000e+30 : f32
    %39 = vector.broadcast %cst_16 : f32 to vector<1x1x16xf32>
    %40 = vector.broadcast %cst_17 : f32 to vector<1x1x16xf32>
    %41 = arith.select %38, %39, %40 : vector<1x1x16xi1>, vector<1x1x16xf32>
    %42 = vector.extract_strided_slice %35 {offsets = [0, 0, 0], sizes = [1, 16, 8], strides = [1, 1, 1]} : vector<1x16x96xbf16> to vector<1x16x8xbf16>
    %43 = vector.extract_strided_slice %35 {offsets = [0, 0, 32], sizes = [1, 16, 8], strides = [1, 1, 1]} : vector<1x16x96xbf16> to vector<1x16x8xbf16>
    %44 = vector.extract_strided_slice %35 {offsets = [0, 0, 64], sizes = [1, 16, 8], strides = [1, 1, 1]} : vector<1x16x96xbf16> to vector<1x16x8xbf16>
    "tpu.trace_start"() <{level = 10 : i32, message = "bnd,bmd->bnm"}> : () -> ()
    %cst_18 = arith.constant dense<0.000000e+00> : vector<1x16x16xf32>
    %45 = tpu.matmul %42, %43, %cst_18 {dimension_numbers = #tpu.dot_dimension_numbers<[2], [2], [1], [1], [0, 0, 0, 1, 1, 1], [0], [0]>} : vector<1x16x8xbf16>, vector<1x16x8xbf16>, vector<1x16x16xf32> -> vector<1x16x16xf32>
    "tpu.trace_stop"() : () -> ()
    %cst_19 = arith.constant 0.353553385 : f32
    %46 = vector.broadcast %cst_19 : f32 to vector<1x16x16xf32>
    %47 = arith.mulf %45, %46 : vector<1x16x16xf32>
    %48 = vector.broadcast %41 : vector<1x1x16xf32> to vector<1x16x16xf32>
    %49 = arith.addf %47, %48 : vector<1x16x16xf32>
    %cst_20 = arith.constant dense<0xFF800000> : vector<1x16xf32>
    %50 = vector.multi_reduction <maximumf>, %49, %cst_20 [2] : vector<1x16x16xf32> to vector<1x16xf32>
    %51 = vector.shape_cast %50 : vector<1x16xf32> to vector<1x16x1xf32>
    %52 = vector.broadcast %51 : vector<1x16x1xf32> to vector<1x16x16xf32>
    %53 = arith.subf %49, %52 : vector<1x16x16xf32>
    %54 = math.exp %53 : vector<1x16x16xf32>
    %cst_21 = arith.constant dense<0.000000e+00> : vector<1x16xf32>
    %55 = vector.multi_reduction <add>, %54, %cst_21 [2] : vector<1x16x16xf32> to vector<1x16xf32>
    %56 = vector.shape_cast %55 : vector<1x16xf32> to vector<1x16x1xf32>
    %57 = tpu.reciprocal %56 {approx = true} : vector<1x16x1xf32> -> vector<1x16x1xf32>
    %58 = vector.broadcast %57 : vector<1x16x1xf32> to vector<1x16x16xf32>
    %59 = arith.mulf %54, %58 : vector<1x16x16xf32>
    %60 = arith.truncf %59 : vector<1x16x16xf32> to vector<1x16x16xbf16>
    "tpu.trace_start"() <{level = 10 : i32, message = "bnm,bmd->bnd"}> : () -> ()
    %cst_22 = arith.constant dense<0.000000e+00> : vector<1x16x8xf32>
    %61 = tpu.matmul %60, %44, %cst_22 {dimension_numbers = #tpu.dot_dimension_numbers<[2], [1], [1], [2], [0, 0, 0, 1, 1, 2], [0], [0]>} : vector<1x16x16xbf16>, vector<1x16x8xbf16>, vector<1x16x8xf32> -> vector<1x16x8xf32>
    "tpu.trace_stop"() : () -> ()
    %62 = vector.shape_cast %61 : vector<1x16x8xf32> to vector<16x8xf32>
    %63 = arith.truncf %62 : vector<16x8xf32> to vector<16x8xbf16>
    %c0_23 = arith.constant 0 : index
    %c0_24 = arith.constant 0 : index
    %c0_25 = arith.constant 0 : index
    %64 = vector.load %arg6[%c0_23, %c0_24, %c0_25] : memref<1x32x32xbf16, #tpu.memory_space<vmem>>, vector<1x8x32xbf16>
    %65 = vector.shape_cast %64 : vector<1x8x32xbf16> to vector<8x32xbf16>
    %cst_26 = arith.constant dense<0.000000e+00> : vector<16x32xf32>
    %66 = tpu.matmul %63, %65, %cst_26 {dimension_numbers = #tpu.dot_dimension_numbers<[1], [0], [0], [1], [0, 0, 1, 1], [], []>} : vector<16x8xbf16>, vector<8x32xbf16>, vector<16x32xf32> -> vector<16x32xf32>
    %67 = vector.extract_strided_slice %35 {offsets = [0, 0, 8], sizes = [1, 16, 8], strides = [1, 1, 1]} : vector<1x16x96xbf16> to vector<1x16x8xbf16>
    %68 = vector.extract_strided_slice %35 {offsets = [0, 0, 40], sizes = [1, 16, 8], strides = [1, 1, 1]} : vector<1x16x96xbf16> to vector<1x16x8xbf16>
    %69 = vector.extract_strided_slice %35 {offsets = [0, 0, 72], sizes = [1, 16, 8], strides = [1, 1, 1]} : vector<1x16x96xbf16> to vector<1x16x8xbf16>
    "tpu.trace_start"() <{level = 10 : i32, message = "bnd,bmd->bnm"}> : () -> ()
    %cst_27 = arith.constant dense<0.000000e+00> : vector<1x16x16xf32>
    %70 = tpu.matmul %67, %68, %cst_27 {dimension_numbers = #tpu.dot_dimension_numbers<[2], [2], [1], [1], [0, 0, 0, 1, 1, 1], [0], [0]>} : vector<1x16x8xbf16>, vector<1x16x8xbf16>, vector<1x16x16xf32> -> vector<1x16x16xf32>
    "tpu.trace_stop"() : () -> ()
    %cst_28 = arith.constant 0.353553385 : f32
    %71 = vector.broadcast %cst_28 : f32 to vector<1x16x16xf32>
    %72 = arith.mulf %70, %71 : vector<1x16x16xf32>
    %73 = vector.broadcast %41 : vector<1x1x16xf32> to vector<1x16x16xf32>
    %74 = arith.addf %72, %73 : vector<1x16x16xf32>
    %cst_29 = arith.constant dense<0xFF800000> : vector<1x16xf32>
    %75 = vector.multi_reduction <maximumf>, %74, %cst_29 [2] : vector<1x16x16xf32> to vector<1x16xf32>
    %76 = vector.shape_cast %75 : vector<1x16xf32> to vector<1x16x1xf32>
    %77 = vector.broadcast %76 : vector<1x16x1xf32> to vector<1x16x16xf32>
    %78 = arith.subf %74, %77 : vector<1x16x16xf32>
    %79 = math.exp %78 : vector<1x16x16xf32>
    %cst_30 = arith.constant dense<0.000000e+00> : vector<1x16xf32>
    %80 = vector.multi_reduction <add>, %79, %cst_30 [2] : vector<1x16x16xf32> to vector<1x16xf32>
    %81 = vector.shape_cast %80 : vector<1x16xf32> to vector<1x16x1xf32>
    %82 = tpu.reciprocal %81 {approx = true} : vector<1x16x1xf32> -> vector<1x16x1xf32>
    %83 = vector.broadcast %82 : vector<1x16x1xf32> to vector<1x16x16xf32>
    %84 = arith.mulf %79, %83 : vector<1x16x16xf32>
    %85 = arith.truncf %84 : vector<1x16x16xf32> to vector<1x16x16xbf16>
    "tpu.trace_start"() <{level = 10 : i32, message = "bnm,bmd->bnd"}> : () -> ()
    %cst_31 = arith.constant dense<0.000000e+00> : vector<1x16x8xf32>
    %86 = tpu.matmul %85, %69, %cst_31 {dimension_numbers = #tpu.dot_dimension_numbers<[2], [1], [1], [2], [0, 0, 0, 1, 1, 2], [0], [0]>} : vector<1x16x16xbf16>, vector<1x16x8xbf16>, vector<1x16x8xf32> -> vector<1x16x8xf32>
    "tpu.trace_stop"() : () -> ()
    %87 = vector.shape_cast %86 : vector<1x16x8xf32> to vector<16x8xf32>
    %88 = arith.truncf %87 : vector<16x8xf32> to vector<16x8xbf16>
    %c0_32 = arith.constant 0 : index
    %c8 = arith.constant 8 : index
    %c0_33 = arith.constant 0 : index
    %89 = vector.load %arg6[%c0_32, %c8, %c0_33] : memref<1x32x32xbf16, #tpu.memory_space<vmem>>, vector<1x8x32xbf16>
    %90 = vector.shape_cast %89 : vector<1x8x32xbf16> to vector<8x32xbf16>
    %cst_34 = arith.constant dense<0.000000e+00> : vector<16x32xf32>
    %91 = tpu.matmul %88, %90, %cst_34 {dimension_numbers = #tpu.dot_dimension_numbers<[1], [0], [0], [1], [0, 0, 1, 1], [], []>} : vector<16x8xbf16>, vector<8x32xbf16>, vector<16x32xf32> -> vector<16x32xf32>
    %92 = arith.addf %66, %91 : vector<16x32xf32>
    %93 = vector.extract_strided_slice %35 {offsets = [0, 0, 16], sizes = [1, 16, 8], strides = [1, 1, 1]} : vector<1x16x96xbf16> to vector<1x16x8xbf16>
    %94 = vector.extract_strided_slice %35 {offsets = [0, 0, 48], sizes = [1, 16, 8], strides = [1, 1, 1]} : vector<1x16x96xbf16> to vector<1x16x8xbf16>
    %95 = vector.extract_strided_slice %35 {offsets = [0, 0, 80], sizes = [1, 16, 8], strides = [1, 1, 1]} : vector<1x16x96xbf16> to vector<1x16x8xbf16>
    "tpu.trace_start"() <{level = 10 : i32, message = "bnd,bmd->bnm"}> : () -> ()
    %cst_35 = arith.constant dense<0.000000e+00> : vector<1x16x16xf32>
    %96 = tpu.matmul %93, %94, %cst_35 {dimension_numbers = #tpu.dot_dimension_numbers<[2], [2], [1], [1], [0, 0, 0, 1, 1, 1], [0], [0]>} : vector<1x16x8xbf16>, vector<1x16x8xbf16>, vector<1x16x16xf32> -> vector<1x16x16xf32>
    "tpu.trace_stop"() : () -> ()
    %cst_36 = arith.constant 0.353553385 : f32
    %97 = vector.broadcast %cst_36 : f32 to vector<1x16x16xf32>
    %98 = arith.mulf %96, %97 : vector<1x16x16xf32>
    %99 = vector.broadcast %41 : vector<1x1x16xf32> to vector<1x16x16xf32>
    %100 = arith.addf %98, %99 : vector<1x16x16xf32>
    %cst_37 = arith.constant dense<0xFF800000> : vector<1x16xf32>
    %101 = vector.multi_reduction <maximumf>, %100, %cst_37 [2] : vector<1x16x16xf32> to vector<1x16xf32>
    %102 = vector.shape_cast %101 : vector<1x16xf32> to vector<1x16x1xf32>
    %103 = vector.broadcast %102 : vector<1x16x1xf32> to vector<1x16x16xf32>
    %104 = arith.subf %100, %103 : vector<1x16x16xf32>
    %105 = math.exp %104 : vector<1x16x16xf32>
    %cst_38 = arith.constant dense<0.000000e+00> : vector<1x16xf32>
    %106 = vector.multi_reduction <add>, %105, %cst_38 [2] : vector<1x16x16xf32> to vector<1x16xf32>
    %107 = vector.shape_cast %106 : vector<1x16xf32> to vector<1x16x1xf32>
    %108 = tpu.reciprocal %107 {approx = true} : vector<1x16x1xf32> -> vector<1x16x1xf32>
    %109 = vector.broadcast %108 : vector<1x16x1xf32> to vector<1x16x16xf32>
    %110 = arith.mulf %105, %109 : vector<1x16x16xf32>
    %111 = arith.truncf %110 : vector<1x16x16xf32> to vector<1x16x16xbf16>
    "tpu.trace_start"() <{level = 10 : i32, message = "bnm,bmd->bnd"}> : () -> ()
    %cst_39 = arith.constant dense<0.000000e+00> : vector<1x16x8xf32>
    %112 = tpu.matmul %111, %95, %cst_39 {dimension_numbers = #tpu.dot_dimension_numbers<[2], [1], [1], [2], [0, 0, 0, 1, 1, 2], [0], [0]>} : vector<1x16x16xbf16>, vector<1x16x8xbf16>, vector<1x16x8xf32> -> vector<1x16x8xf32>
    "tpu.trace_stop"() : () -> ()
    %113 = vector.shape_cast %112 : vector<1x16x8xf32> to vector<16x8xf32>
    %114 = arith.truncf %113 : vector<16x8xf32> to vector<16x8xbf16>
    %c0_40 = arith.constant 0 : index
    %c16 = arith.constant 16 : index
    %c0_41 = arith.constant 0 : index
    %115 = vector.load %arg6[%c0_40, %c16, %c0_41] : memref<1x32x32xbf16, #tpu.memory_space<vmem>>, vector<1x8x32xbf16>
    %116 = vector.shape_cast %115 : vector<1x8x32xbf16> to vector<8x32xbf16>
    %cst_42 = arith.constant dense<0.000000e+00> : vector<16x32xf32>
    %117 = tpu.matmul %114, %116, %cst_42 {dimension_numbers = #tpu.dot_dimension_numbers<[1], [0], [0], [1], [0, 0, 1, 1], [], []>} : vector<16x8xbf16>, vector<8x32xbf16>, vector<16x32xf32> -> vector<16x32xf32>
    %118 = arith.addf %92, %117 : vector<16x32xf32>
    %119 = vector.extract_strided_slice %35 {offsets = [0, 0, 24], sizes = [1, 16, 8], strides = [1, 1, 1]} : vector<1x16x96xbf16> to vector<1x16x8xbf16>
    %120 = vector.extract_strided_slice %35 {offsets = [0, 0, 56], sizes = [1, 16, 8], strides = [1, 1, 1]} : vector<1x16x96xbf16> to vector<1x16x8xbf16>
    %121 = vector.extract_strided_slice %35 {offsets = [0, 0, 88], sizes = [1, 16, 8], strides = [1, 1, 1]} : vector<1x16x96xbf16> to vector<1x16x8xbf16>
    "tpu.trace_start"() <{level = 10 : i32, message = "bnd,bmd->bnm"}> : () -> ()
    %cst_43 = arith.constant dense<0.000000e+00> : vector<1x16x16xf32>
    %122 = tpu.matmul %119, %120, %cst_43 {dimension_numbers = #tpu.dot_dimension_numbers<[2], [2], [1], [1], [0, 0, 0, 1, 1, 1], [0], [0]>} : vector<1x16x8xbf16>, vector<1x16x8xbf16>, vector<1x16x16xf32> -> vector<1x16x16xf32>
    "tpu.trace_stop"() : () -> ()
    %cst_44 = arith.constant 0.353553385 : f32
    %123 = vector.broadcast %cst_44 : f32 to vector<1x16x16xf32>
    %124 = arith.mulf %122, %123 : vector<1x16x16xf32>
    %125 = vector.broadcast %41 : vector<1x1x16xf32> to vector<1x16x16xf32>
    %126 = arith.addf %124, %125 : vector<1x16x16xf32>
    %cst_45 = arith.constant dense<0xFF800000> : vector<1x16xf32>
    %127 = vector.multi_reduction <maximumf>, %126, %cst_45 [2] : vector<1x16x16xf32> to vector<1x16xf32>
    %128 = vector.shape_cast %127 : vector<1x16xf32> to vector<1x16x1xf32>
    %129 = vector.broadcast %128 : vector<1x16x1xf32> to vector<1x16x16xf32>
    %130 = arith.subf %126, %129 : vector<1x16x16xf32>
    %131 = math.exp %130 : vector<1x16x16xf32>
    %cst_46 = arith.constant dense<0.000000e+00> : vector<1x16xf32>
    %132 = vector.multi_reduction <add>, %131, %cst_46 [2] : vector<1x16x16xf32> to vector<1x16xf32>
    %133 = vector.shape_cast %132 : vector<1x16xf32> to vector<1x16x1xf32>
    %134 = tpu.reciprocal %133 {approx = true} : vector<1x16x1xf32> -> vector<1x16x1xf32>
    %135 = vector.broadcast %134 : vector<1x16x1xf32> to vector<1x16x16xf32>
    %136 = arith.mulf %131, %135 : vector<1x16x16xf32>
    %137 = arith.truncf %136 : vector<1x16x16xf32> to vector<1x16x16xbf16>
    "tpu.trace_start"() <{level = 10 : i32, message = "bnm,bmd->bnd"}> : () -> ()
    %cst_47 = arith.constant dense<0.000000e+00> : vector<1x16x8xf32>
    %138 = tpu.matmul %137, %121, %cst_47 {dimension_numbers = #tpu.dot_dimension_numbers<[2], [1], [1], [2], [0, 0, 0, 1, 1, 2], [0], [0]>} : vector<1x16x16xbf16>, vector<1x16x8xbf16>, vector<1x16x8xf32> -> vector<1x16x8xf32>
    "tpu.trace_stop"() : () -> ()
    %139 = vector.shape_cast %138 : vector<1x16x8xf32> to vector<16x8xf32>
    %140 = arith.truncf %139 : vector<16x8xf32> to vector<16x8xbf16>
    %c0_48 = arith.constant 0 : index
    %c24 = arith.constant 24 : index
    %c0_49 = arith.constant 0 : index
    %141 = vector.load %arg6[%c0_48, %c24, %c0_49] : memref<1x32x32xbf16, #tpu.memory_space<vmem>>, vector<1x8x32xbf16>
    %142 = vector.shape_cast %141 : vector<1x8x32xbf16> to vector<8x32xbf16>
    %cst_50 = arith.constant dense<0.000000e+00> : vector<16x32xf32>
    %143 = tpu.matmul %140, %142, %cst_50 {dimension_numbers = #tpu.dot_dimension_numbers<[1], [0], [0], [1], [0, 0, 1, 1], [], []>} : vector<16x8xbf16>, vector<8x32xbf16>, vector<16x32xf32> -> vector<16x32xf32>
    %144 = arith.addf %118, %143 : vector<16x32xf32>
    %145 = arith.addf %3, %144 : vector<16x32xf32>
    %c0_51 = arith.constant 0 : index
    %c0_52 = arith.constant 0 : index
    %c0_53 = arith.constant 0 : index
    %146 = vector.load %arg7[%c0_51, %c0_52, %c0_53] : memref<1x1x32xf32, #tpu.memory_space<vmem>>, vector<1x1x32xf32>
    %147 = vector.shape_cast %146 : vector<1x1x32xf32> to vector<1x32xf32>
    %148 = vector.broadcast %147 : vector<1x32xf32> to vector<16x32xf32>
    %149 = arith.addf %145, %148 : vector<16x32xf32>
    %c0_54 = arith.constant 0 : index
    %c0_55 = arith.constant 0 : index
    %c0_56 = arith.constant 0 : index
    %150 = vector.load %arg8[%c0_54, %c0_55, %c0_56] : memref<1x1x32xf32, #tpu.memory_space<vmem>>, vector<1x1x32xf32>
    %151 = vector.shape_cast %150 : vector<1x1x32xf32> to vector<1x32xf32>
    %c0_57 = arith.constant 0 : index
    %c0_58 = arith.constant 0 : index
    %c0_59 = arith.constant 0 : index
    %152 = vector.load %arg9[%c0_57, %c0_58, %c0_59] : memref<1x1x32xf32, #tpu.memory_space<vmem>>, vector<1x1x32xf32>
    %153 = vector.shape_cast %152 : vector<1x1x32xf32> to vector<1x32xf32>
    %cst_60 = arith.constant dense<0.000000e+00> : vector<16xf32>
    %154 = vector.multi_reduction <add>, %149, %cst_60 [1] : vector<16x32xf32> to vector<16xf32>
    %155 = vector.shape_cast %154 : vector<16xf32> to vector<16x1xf32>
    %cst_61 = arith.constant 3.200000e+01 : f32
    %156 = vector.broadcast %cst_61 : f32 to vector<16x1xf32>
    %157 = arith.divf %155, %156 : vector<16x1xf32>
    %158 = vector.broadcast %157 : vector<16x1xf32> to vector<16x32xf32>
    %159 = arith.subf %149, %158 : vector<16x32xf32>
    %160 = arith.mulf %159, %159 : vector<16x32xf32>
    %cst_62 = arith.constant dense<0.000000e+00> : vector<16xf32>
    %161 = vector.multi_reduction <add>, %160, %cst_62 [1] : vector<16x32xf32> to vector<16xf32>
    %162 = vector.shape_cast %161 : vector<16xf32> to vector<16x1xf32>
    %cst_63 = arith.constant 3.200000e+01 : f32
    %163 = vector.broadcast %cst_63 : f32 to vector<16x1xf32>
    %164 = arith.divf %162, %163 : vector<16x1xf32>
    %165 = vector.broadcast %157 : vector<16x1xf32> to vector<16x32xf32>
    %166 = arith.subf %149, %165 : vector<16x32xf32>
    %cst_64 = arith.constant 9.99999974E-6 : f32
    %167 = vector.broadcast %cst_64 : f32 to vector<16x1xf32>
    %168 = arith.addf %164, %167 : vector<16x1xf32>
    %169 = math.rsqrt %168 : vector<16x1xf32>
    %170 = vector.broadcast %169 : vector<16x1xf32> to vector<16x32xf32>
    %171 = arith.mulf %166, %170 : vector<16x32xf32>
    %172 = vector.broadcast %151 : vector<1x32xf32> to vector<16x32xf32>
    %173 = arith.mulf %171, %172 : vector<16x32xf32>
    %174 = vector.broadcast %153 : vector<1x32xf32> to vector<16x32xf32>
    %175 = arith.addf %173, %174 : vector<16x32xf32>
    %176 = arith.truncf %175 : vector<16x32xf32> to vector<16x32xbf16>
    %c0_65 = arith.constant 0 : index
    %c0_66 = arith.constant 0 : index
    %c0_67 = arith.constant 0 : index
    %177 = vector.load %arg10[%c0_65, %c0_66, %c0_67] : memref<1x32x64xbf16, #tpu.memory_space<vmem>>, vector<1x32x64xbf16>
    %178 = vector.shape_cast %177 : vector<1x32x64xbf16> to vector<32x64xbf16>
    %cst_68 = arith.constant dense<0.000000e+00> : vector<16x64xf32>
    %179 = tpu.matmul %176, %178, %cst_68 {dimension_numbers = #tpu.dot_dimension_numbers<[1], [0], [0], [1], [0, 0, 1, 1], [], []>} : vector<16x32xbf16>, vector<32x64xbf16>, vector<16x64xf32> -> vector<16x64xf32>
    %c0_69 = arith.constant 0 : index
    %c0_70 = arith.constant 0 : index
    %c0_71 = arith.constant 0 : index
    %180 = vector.load %arg11[%c0_69, %c0_70, %c0_71] : memref<1x1x64xf32, #tpu.memory_space<vmem>>, vector<1x1x64xf32>
    %181 = vector.shape_cast %180 : vector<1x1x64xf32> to vector<1x64xf32>
    %182 = vector.broadcast %181 : vector<1x64xf32> to vector<16x64xf32>
    %183 = arith.addf %179, %182 : vector<16x64xf32>
    %cst_72 = arith.constant 5.000000e-01 : f32
    %184 = vector.broadcast %cst_72 : f32 to vector<16x64xf32>
    %185 = arith.mulf %184, %183 : vector<16x64xf32>
    %cst_73 = arith.constant 0.707106769 : f32
    %186 = vector.broadcast %cst_73 : f32 to vector<16x64xf32>
    %187 = arith.mulf %183, %186 : vector<16x64xf32>
    %188 = math.erf %187 : vector<16x64xf32>
    %cst_74 = arith.constant 1.000000e+00 : f32
    %189 = vector.broadcast %cst_74 : f32 to vector<16x64xf32>
    %190 = arith.addf %189, %188 : vector<16x64xf32>
    %191 = arith.mulf %185, %190 : vector<16x64xf32>
    %192 = arith.truncf %191 : vector<16x64xf32> to vector<16x64xbf16>
    %c0_75 = arith.constant 0 : index
    %c0_76 = arith.constant 0 : index
    %c0_77 = arith.constant 0 : index
    %193 = vector.load %arg12[%c0_75, %c0_76, %c0_77] : memref<1x64x32xbf16, #tpu.memory_space<vmem>>, vector<1x64x32xbf16>
    %194 = vector.shape_cast %193 : vector<1x64x32xbf16> to vector<64x32xbf16>
    %cst_78 = arith.constant dense<0.000000e+00> : vector<16x32xf32>
    %195 = tpu.matmul %192, %194, %cst_78 {dimension_numbers = #tpu.dot_dimension_numbers<[1], [0], [0], [1], [0, 0, 1, 1], [], []>} : vector<16x64xbf16>, vector<64x32xbf16>, vector<16x32xf32> -> vector<16x32xf32>
    %c0_79 = arith.constant 0 : index
    %c0_80 = arith.constant 0 : index
    %c0_81 = arith.constant 0 : index
    %196 = vector.load %arg13[%c0_79, %c0_80, %c0_81] : memref<1x1x32xf32, #tpu.memory_space<vmem>>, vector<1x1x32xf32>
    %197 = vector.shape_cast %196 : vector<1x1x32xf32> to vector<1x32xf32>
    %198 = vector.broadcast %197 : vector<1x32xf32> to vector<16x32xf32>
    %199 = arith.addf %195, %198 : vector<16x32xf32>
    %200 = arith.addf %149, %199 : vector<16x32xf32>
    %c0_82 = arith.constant 0 : index
    %c0_83 = arith.constant 0 : index
    %201 = vector.load %arg19[%c0_82, %c0_83] : memref<16x32xf32, #tpu.memory_space<vmem>>, vector<16x32xf32>
    tpu.vector_store %arg19[%c0_82, %c0_83], %200 {strides = array<i32>} : memref<16x32xf32, #tpu.memory_space<vmem>>, vector<16x32xf32>,
    %c1_i32 = arith.constant 1 : i32
    %202 = arith.cmpi eq, %arg1, %c1_i32 : i32
    %203 = arith.extui %202 : i1 to i32
    %c0_i32_84 = arith.constant 0 : i32
    %204 = arith.cmpi ne, %203, %c0_i32_84 : i32
    scf.if %204 {
      %205 = vector.shape_cast %200 : vector<16x32xf32> to vector<1x16x32xf32>
      %206 = vector.extract_strided_slice %205 {offsets = [0, 0, 0], sizes = [1, 1, 32], strides = [1, 1, 1]} : vector<1x16x32xf32> to vector<1x1x32xf32>
      %207 = vector.shape_cast %206 : vector<1x1x32xf32> to vector<1x32xf32>
      %c0_85 = arith.constant 0 : index
      %c0_86 = arith.constant 0 : index
      %208 = vector.load %arg14[%c0_85, %c0_86] : memref<1x32xf32, #tpu.memory_space<vmem>>, vector<1x32xf32>
      %c0_87 = arith.constant 0 : index
      %c0_88 = arith.constant 0 : index
      %209 = vector.load %arg15[%c0_87, %c0_88] : memref<1x32xf32, #tpu.memory_space<vmem>>, vector<1x32xf32>
      %cst_89 = arith.constant dense<0.000000e+00> : vector<1xf32>
      %210 = vector.multi_reduction <add>, %207, %cst_89 [1] : vector<1x32xf32> to vector<1xf32>
      %211 = vector.shape_cast %210 : vector<1xf32> to vector<1x1xf32>
      %cst_90 = arith.constant 3.200000e+01 : f32
      %212 = vector.broadcast %cst_90 : f32 to vector<1x1xf32>
      %213 = arith.divf %211, %212 : vector<1x1xf32>
      %214 = vector.broadcast %213 : vector<1x1xf32> to vector<1x32xf32>
      %215 = arith.subf %207, %214 : vector<1x32xf32>
      %216 = arith.mulf %215, %215 : vector<1x32xf32>
      %cst_91 = arith.constant dense<0.000000e+00> : vector<1xf32>
      %217 = vector.multi_reduction <add>, %216, %cst_91 [1] : vector<1x32xf32> to vector<1xf32>
      %218 = vector.shape_cast %217 : vector<1xf32> to vector<1x1xf32>
      %cst_92 = arith.constant 3.200000e+01 : f32
      %219 = vector.broadcast %cst_92 : f32 to vector<1x1xf32>
      %220 = arith.divf %218, %219 : vector<1x1xf32>
      %221 = vector.broadcast %213 : vector<1x1xf32> to vector<1x32xf32>
      %222 = arith.subf %207, %221 : vector<1x32xf32>
      %cst_93 = arith.constant 9.99999974E-6 : f32
      %223 = vector.broadcast %cst_93 : f32 to vector<1x1xf32>
      %224 = arith.addf %220, %223 : vector<1x1xf32>
      %225 = math.rsqrt %224 : vector<1x1xf32>
      %226 = vector.broadcast %225 : vector<1x1xf32> to vector<1x32xf32>
      %227 = arith.mulf %222, %226 : vector<1x32xf32>
      %228 = arith.mulf %227, %208 : vector<1x32xf32>
      %229 = arith.addf %228, %209 : vector<1x32xf32>
      %c0_94 = arith.constant 0 : index
      %c0_95 = arith.constant 0 : index
      %230 = vector.load %arg16[%c0_94, %c0_95] : memref<32x10xf32, #tpu.memory_space<vmem>>, vector<32x10xf32>
      %cst_96 = arith.constant dense<0.000000e+00> : vector<1x10xf32>
      %231 = tpu.matmul %229, %230, %cst_96 {dimension_numbers = #tpu.dot_dimension_numbers<[1], [0], [0], [1], [0, 0, 1, 1], [], []>} : vector<1x32xf32>, vector<32x10xf32>, vector<1x10xf32> -> vector<1x10xf32>
      %c0_97 = arith.constant 0 : index
      %c0_98 = arith.constant 0 : index
      %232 = vector.load %arg17[%c0_97, %c0_98] : memref<1x10xf32, #tpu.memory_space<vmem>>, vector<1x10xf32>
      %233 = arith.addf %231, %232 : vector<1x10xf32>
      %234 = vector.shape_cast %233 : vector<1x10xf32> to vector<1x1x10xf32>
      %c0_99 = arith.constant 0 : index
      %c0_100 = arith.constant 0 : index
      %c0_101 = arith.constant 0 : index
      %235 = vector.load %arg18[%c0_99, %c0_100, %c0_101] : memref<1x1x10xf32, #tpu.memory_space<vmem>>, vector<1x1x10xf32>
      tpu.vector_store %arg18[%c0_99, %c0_100, %c0_101], %234 {strides = array<i32>} : memref<1x1x10xf32, #tpu.memory_space<vmem>>, vector<1x1x10xf32>,
    } else {
    }
    return
  }
  func.func @transform_0(%arg0: i32, %arg1: i32) -> (i32, i32, i32) {
    %c0_i32 = arith.constant 0 : i32
    %c0_i32_0 = arith.constant 0 : i32
    %c0_i32_1 = arith.constant 0 : i32
    return %arg0, %c0_i32, %c0_i32_0 : i32, i32, i32
  }
  func.func @transform_1(%arg0: i32, %arg1: i32) -> (i32, i32, i32) {
    %c0_i32 = arith.constant 0 : i32
    %c0_i32_0 = arith.constant 0 : i32
    %c0_i32_1 = arith.constant 0 : i32
    return %arg1, %c0_i32, %c0_i32_0 : i32, i32, i32
  }
  func.func @transform_2(%arg0: i32, %arg1: i32) -> (i32, i32, i32) {
    %c0_i32 = arith.constant 0 : i32
    %c0_i32_0 = arith.constant 0 : i32
    %c0_i32_1 = arith.constant 0 : i32
    return %arg1, %c0_i32, %c0_i32_0 : i32, i32, i32
  }
  func.func @transform_3(%arg0: i32, %arg1: i32) -> (i32, i32, i32) {
    %c0_i32 = arith.constant 0 : i32
    %c0_i32_0 = arith.constant 0 : i32
    %c0_i32_1 = arith.constant 0 : i32
    return %arg1, %c0_i32, %c0_i32_0 : i32, i32, i32
  }
  func.func @transform_4(%arg0: i32, %arg1: i32) -> (i32, i32, i32) {
    %c0_i32 = arith.constant 0 : i32
    %c0_i32_0 = arith.constant 0 : i32
    %c0_i32_1 = arith.constant 0 : i32
    return %arg1, %c0_i32, %c0_i32_0 : i32, i32, i32
  }
  func.func @transform_5(%arg0: i32, %arg1: i32) -> (i32, i32, i32) {
    %c0_i32 = arith.constant 0 : i32
    %c0_i32_0 = arith.constant 0 : i32
    %c0_i32_1 = arith.constant 0 : i32
    return %arg1, %c0_i32, %c0_i32_0 : i32, i32, i32
  }
  func.func @transform_6(%arg0: i32, %arg1: i32) -> (i32, i32, i32) {
    %c0_i32 = arith.constant 0 : i32
    %c0_i32_0 = arith.constant 0 : i32
    %c0_i32_1 = arith.constant 0 : i32
    return %arg1, %c0_i32, %c0_i32_0 : i32, i32, i32
  }
  func.func @transform_7(%arg0: i32, %arg1: i32) -> (i32, i32, i32) {
    %c0_i32 = arith.constant 0 : i32
    %c0_i32_0 = arith.constant 0 : i32
    %c0_i32_1 = arith.constant 0 : i32
    return %arg1, %c0_i32, %c0_i32_0 : i32, i32, i32
  }
  func.func @transform_8(%arg0: i32, %arg1: i32) -> (i32, i32, i32) {
    %c0_i32 = arith.constant 0 : i32
    %c0_i32_0 = arith.constant 0 : i32
    %c0_i32_1 = arith.constant 0 : i32
    return %arg1, %c0_i32, %c0_i32_0 : i32, i32, i32
  }
  func.func @transform_9(%arg0: i32, %arg1: i32) -> (i32, i32, i32) {
    %c0_i32 = arith.constant 0 : i32
    %c0_i32_0 = arith.constant 0 : i32
    %c0_i32_1 = arith.constant 0 : i32
    return %arg1, %c0_i32, %c0_i32_0 : i32, i32, i32
  }
  func.func @transform_10(%arg0: i32, %arg1: i32) -> (i32, i32, i32) {
    %c0_i32 = arith.constant 0 : i32
    %c0_i32_0 = arith.constant 0 : i32
    %c0_i32_1 = arith.constant 0 : i32
    return %arg1, %c0_i32, %c0_i32_0 : i32, i32, i32
  }
  func.func @transform_11(%arg0: i32, %arg1: i32) -> (i32, i32, i32) {
    %c0_i32 = arith.constant 0 : i32
    %c0_i32_0 = arith.constant 0 : i32
    %c0_i32_1 = arith.constant 0 : i32
    return %arg1, %c0_i32, %c0_i32_0 : i32, i32, i32
  }
  func.func @transform_12(%arg0: i32, %arg1: i32) -> (i32, i32) {
    %c0_i32 = arith.constant 0 : i32
    %c0_i32_0 = arith.constant 0 : i32
    %c0_i32_1 = arith.constant 0 : i32
    return %c0_i32, %c0_i32_0 : i32, i32
  }
  func.func @transform_13(%arg0: i32, %arg1: i32) -> (i32, i32) {
    %c0_i32 = arith.constant 0 : i32
    %c0_i32_0 = arith.constant 0 : i32
    %c0_i32_1 = arith.constant 0 : i32
    return %c0_i32, %c0_i32_0 : i32, i32
  }
  func.func @transform_14(%arg0: i32, %arg1: i32) -> (i32, i32) {
    %c0_i32 = arith.constant 0 : i32
    %c0_i32_0 = arith.constant 0 : i32
    %c0_i32_1 = arith.constant 0 : i32
    return %c0_i32, %c0_i32_0 : i32, i32
  }
  func.func @transform_15(%arg0: i32, %arg1: i32) -> (i32, i32) {
    %c0_i32 = arith.constant 0 : i32
    %c0_i32_0 = arith.constant 0 : i32
    %c0_i32_1 = arith.constant 0 : i32
    return %c0_i32, %c0_i32_0 : i32, i32
  }
  func.func @transform_16(%arg0: i32, %arg1: i32) -> (i32, i32, i32) {
    %c0_i32 = arith.constant 0 : i32
    %c0_i32_0 = arith.constant 0 : i32
    %c0_i32_1 = arith.constant 0 : i32
    return %arg0, %c0_i32, %c0_i32_0 : i32, i32, i32
  }
}

</mosaic_0001>

<llo_original>
// kernel: transformer_classifier.1
$region0: #{transformer_classifier.1}
  #allocation0 [shape = 'u32[]', space=smem, size = 0x4, offset = 0x4, fixed_abs, tag = 'smem constant byte address 0x4 - core index']
  #allocation1 [shape = 'u32[144,128]{1,0:T(1,128)}', space=vmem, size = 0x12000, scoped, tag = 'internal scratch']
  #allocation2 [shape = 'f32[16,32]{1,0:T(8,128)}', space=vmem, size = 0x2000, scoped, tag = 'scratch operand']
  %s0 = inlined_call_operand.vmem [shape: f32[2,16,32], index: 0, kind: input, shape index: {}]
  %s1 = inlined_call_operand.vmem [shape: f32[2,1,32], index: 1, kind: input, shape index: {}]
  %s2 = inlined_call_operand.vmem [shape: f32[2,1,32], index: 2, kind: input, shape index: {}]
  %s3 = inlined_call_operand.vmem [shape: bf16[2,32,96], index: 3, kind: input, shape index: {}]
  %s4 = inlined_call_operand.vmem [shape: bf16[2,32,32], index: 4, kind: input, shape index: {}]
  %s5 = inlined_call_operand.vmem [shape: f32[2,1,32], index: 5, kind: input, shape index: {}]
  %s6 = inlined_call_operand.vmem [shape: f32[2,1,32], index: 6, kind: input, shape index: {}]
  %s7 = inlined_call_operand.vmem [shape: f32[2,1,32], index: 7, kind: input, shape index: {}]
  %s8 = inlined_call_operand.vmem [shape: bf16[2,32,64], index: 8, kind: input, shape index: {}]
  %s9 = inlined_call_operand.vmem [shape: f32[2,1,64], index: 9, kind: input, shape index: {}]
  %s10 = inlined_call_operand.vmem [shape: bf16[2,64,32], index: 10, kind: input, shape index: {}]
  %s11 = inlined_call_operand.vmem [shape: f32[2,1,32], index: 11, kind: input, shape index: {}]
  %s12 = inlined_call_operand.vmem [shape: f32[1,32], index: 12, kind: input, shape index: {}]
  %s13 = inlined_call_operand.vmem [shape: f32[1,32], index: 13, kind: input, shape index: {}]
  %s14 = inlined_call_operand.vmem [shape: f32[32,10], index: 14, kind: input, shape index: {}]
  %s15 = inlined_call_operand.vmem [shape: f32[1,10], index: 15, kind: input, shape index: {}]
  %s16 = inlined_call_operand.hbm [shape: f32[2,1,10], index: 16, kind: output, shape index: {}]
  %s17 = sld [smem:[#allocation0]]
  $region105: #{transformer_classifier.1} parent=0
    _
  %s19 = ssub.s32 1, %s17
  %s20 = scalar_select 0, %s19, %s17
  $region1: #{transformer_classifier.1} parent=0
    #allocation3 [shape = 'u8[1024]{0}', space=vmem, size = 0x400, scoped, tag = 'output window, operand 0']
    #allocation4 [shape = 's32[2]{0}', space=sflag, size = 0x8, scoped, tag = 'scoped memory for transformer_classifier.1']
    %21 = vsyncpa [#allocation4], 0
    %s22 = scalar_lea.sflag [#allocation4], 1
    %23 = vsyncpa %s22, 0
    loop: start=0, step=1, limit=6
    $region2: #{transformer_classifier.1} parent=1 // loop_pre_header
      _
    $region3: #{transformer_classifier.1} parent=1 // loop_header
      %s25 = sphi 0, %s29
      %p26 = scmp.ge.s32.totalorder %s25, 6
      %s32 = sphi 0, %s44
      %s33 = sphi 0, %s40
      %s34 = sphi 0, %s32
      %s35 = sphi 0, %s33
      %s36 = sphi 0, %s34
      %s37 = sphi 0, %s35
      %s47 = sphi 0, %s49
      %s50 = sphi 0, %s47
      %s51 = sphi 0, %s50
      %s67 = sphi 0, %s51
      %s73 = sphi 0, %s75
      %s76 = sphi 0, %s73
      %s77 = sphi 0, %s76
      %s93 = sphi 0, %s77
      %s99 = sphi 0, %s101
      %s102 = sphi 0, %s99
      %s103 = sphi 0, %s102
      %s119 = sphi 0, %s103
      %s125 = sphi 0, %s127
      %s128 = sphi 0, %s125
      %s129 = sphi 0, %s128
      %s145 = sphi 0, %s129
      %s151 = sphi 0, %s153
      %s154 = sphi 0, %s151
      %s155 = sphi 0, %s154
      %s171 = sphi 0, %s155
      %s177 = sphi 0, %s179
      %s180 = sphi 0, %s177
      %s181 = sphi 0, %s180
      %s197 = sphi 0, %s181
      %s203 = sphi 0, %s205
      %s206 = sphi 0, %s203
      %s207 = sphi 0, %s206
      %s223 = sphi 0, %s207
      %s229 = sphi 0, %s231
      %s232 = sphi 0, %s229
      %s233 = sphi 0, %s232
      %s249 = sphi 0, %s233
      %s255 = sphi 0, %s257
      %s258 = sphi 0, %s255
      %s259 = sphi 0, %s258
      %s275 = sphi 0, %s259
      %s281 = sphi 0, %s283
      %s284 = sphi 0, %s281
      %s285 = sphi 0, %s284
      %s301 = sphi 0, %s285
      %s307 = sphi 0, %s309
      %s310 = sphi 0, %s307
      %s311 = sphi 0, %s310
      %s327 = sphi 0, %s311
      %s333 = sphi 0, %s335
      %s336 = sphi 0, %s333
      %s337 = sphi 0, %s336
      %s353 = sphi 0, %s337
      %s357 = sphi 0, %s357
      %s359 = sphi 0, %s357
      %s360 = sphi 0, %s359
      %s374 = sphi 0, %s360
      %s378 = sphi 0, %s378
      %s380 = sphi 0, %s378
      %s381 = sphi 0, %s380
      %s395 = sphi 0, %s381
      %s399 = sphi 0, %s399
      %s401 = sphi 0, %s399
      %s402 = sphi 0, %s401
      %s416 = sphi 0, %s402
      %s420 = sphi 0, %s420
      %s422 = sphi 0, %s420
      %s423 = sphi 0, %s422
      %s437 = sphi 0, %s423
      %s443 = sphi 0, %s445
      %s446 = sphi 0, %s443
      %s447 = sphi 0, %s446
      %s463 = sphi 0, %s447
    $region4: #{transformer_classifier.1} parent=1 // loop_header_branch
      %28 = sbr.rel (%p26) target = $region8
    $region5: #{transformer_classifier.1} parent=1 // loop_body
      %s30 = ssub.s32 %s25, 1
      %s31 = ssub.s32 %s25, 2
      %s38 = sadd.s32 1, %s33
      %p39 = scmp.ge.s32.totalorder %s38, 2
      %s40 = scalar_select %p39, 0, %s38
      %s41 = sadd.s32 1, %s32
      %s42 = scalar_select %p39, %s41, %s32
      %p43 = scmp.ge.s32.totalorder %s42, 2
      %s44 = scalar_select %p43, 0, %s42
      %s45 = ssub.s32 %s32, %s44
      %p46 = scmp.eq.s32.totalorder %s45, 0
      %s48 = sadd.s32 %s47, 1
      %s49 = scalar_select %p46, %s47, %s48
      %p52 = pneg %p46
      %p53 = scmp.eq.s32.totalorder %s25, 3
      %p54 = por %p52, %p53
      %p55 = scmp.ne.s32.totalorder %s47, %s50
      %p56 = scmp.eq.s32.totalorder %s25, 0
      %p57 = por %p55, %p56
      %p58 = scmp.ne.s32.totalorder %s47, %s50
      %p59 = scmp.eq.s32.totalorder %s30, 3
      %p60 = por %p58, %p59
      %p61 = scmp.ne.s32.totalorder %s50, %s51
      %p62 = scmp.eq.s32.totalorder %s30, 0
      %p63 = por %p61, %p62
      %p64 = scmp.ne.s32.totalorder %s50, %s51
      %p65 = scmp.eq.s32.totalorder %s31, 3
      %p66 = por %p64, %p65
      %p68 = scmp.ne.s32.totalorder %s51, %s67
      %p69 = scmp.eq.s32.totalorder %s31, 0
      %p70 = por %p68, %p69
      %s71 = ssub.s32 %s33, %s40
      %p72 = scmp.eq.s32.totalorder %s71, 0
      %s74 = sadd.s32 %s73, 1
      %s75 = scalar_select %p72, %s73, %s74
      %p78 = pneg %p72
      %p79 = scmp.eq.s32.totalorder %s25, 3
      %p80 = por %p78, %p79
      %p81 = scmp.ne.s32.totalorder %s73, %s76
      %p82 = scmp.eq.s32.totalorder %s25, 0
      %p83 = por %p81, %p82
      %p84 = scmp.ne.s32.totalorder %s73, %s76
      %p85 = scmp.eq.s32.totalorder %s30, 3
      %p86 = por %p84, %p85
      %p87 = scmp.ne.s32.totalorder %s76, %s77
      %p88 = scmp.eq.s32.totalorder %s30, 0
      %p89 = por %p87, %p88
      %p90 = scmp.ne.s32.totalorder %s76, %s77
      %p91 = scmp.eq.s32.totalorder %s31, 3
      %p92 = por %p90, %p91
      %p94 = scmp.ne.s32.totalorder %s77, %s93
      %p95 = scmp.eq.s32.totalorder %s31, 0
      %p96 = por %p94, %p95
      %s97 = ssub.s32 %s33, %s40
      %p98 = scmp.eq.s32.totalorder %s97, 0
      %s100 = sadd.s32 %s99, 1
      %s101 = scalar_select %p98, %s99, %s100
      %p104 = pneg %p98
      %p105 = scmp.eq.s32.totalorder %s25, 3
      %p106 = por %p104, %p105
      %p107 = scmp.ne.s32.totalorder %s99, %s102
      %p108 = scmp.eq.s32.totalorder %s25, 0
      %p109 = por %p107, %p108
      %p110 = scmp.ne.s32.totalorder %s99, %s102
      %p111 = scmp.eq.s32.totalorder %s30, 3
      %p112 = por %p110, %p111
      %p113 = scmp.ne.s32.totalorder %s102, %s103
      %p114 = scmp.eq.s32.totalorder %s30, 0
      %p115 = por %p113, %p114
      %p116 = scmp.ne.s32.totalorder %s102, %s103
      %p117 = scmp.eq.s32.totalorder %s31, 3
      %p118 = por %p116, %p117
      %p120 = scmp.ne.s32.totalorder %s103, %s119
      %p121 = scmp.eq.s32.totalorder %s31, 0
      %p122 = por %p120, %p121
      %s123 = ssub.s32 %s33, %s40
      %p124 = scmp.eq.s32.totalorder %s123, 0
      %s126 = sadd.s32 %s125, 1
      %s127 = scalar_select %p124, %s125, %s126
      %p130 = pneg %p124
      %p131 = scmp.eq.s32.totalorder %s25, 3
      %p132 = por %p130, %p131
      %p133 = scmp.ne.s32.totalorder %s125, %s128
      %p134 = scmp.eq.s32.totalorder %s25, 0
      %p135 = por %p133, %p134
      %p136 = scmp.ne.s32.totalorder %s125, %s128
      %p137 = scmp.eq.s32.totalorder %s30, 3
      %p138 = por %p136, %p137
      %p139 = scmp.ne.s32.totalorder %s128, %s129
      %p140 = scmp.eq.s32.totalorder %s30, 0
      %p141 = por %p139, %p140
      %p142 = scmp.ne.s32.totalorder %s128, %s129
      %p143 = scmp.eq.s32.totalorder %s31, 3
      %p144 = por %p142, %p143
      %p146 = scmp.ne.s32.totalorder %s129, %s145
      %p147 = scmp.eq.s32.totalorder %s31, 0
      %p148 = por %p146, %p147
      %s149 = ssub.s32 %s33, %s40
      %p150 = scmp.eq.s32.totalorder %s149, 0
      %s152 = sadd.s32 %s151, 1
      %s153 = scalar_select %p150, %s151, %s152
      %p156 = pneg %p150
      %p157 = scmp.eq.s32.totalorder %s25, 3
      %p158 = por %p156, %p157
      %p159 = scmp.ne.s32.totalorder %s151, %s154
      %p160 = scmp.eq.s32.totalorder %s25, 0
      %p161 = por %p159, %p160
      %p162 = scmp.ne.s32.totalorder %s151, %s154
      %p163 = scmp.eq.s32.totalorder %s30, 3
      %p164 = por %p162, %p163
      %p165 = scmp.ne.s32.totalorder %s154, %s155
      %p166 = scmp.eq.s32.totalorder %s30, 0
      %p167 = por %p165, %p166
      %p168 = scmp.ne.s32.totalorder %s154, %s155
      %p169 = scmp.eq.s32.totalorder %s31, 3
      %p170 = por %p168, %p169
      %p172 = scmp.ne.s32.totalorder %s155, %s171
      %p173 = scmp.eq.s32.totalorder %s31, 0
      %p174 = por %p172, %p173
      %s175 = ssub.s32 %s33, %s40
      %p176 = scmp.eq.s32.totalorder %s175, 0
      %s178 = sadd.s32 %s177, 1
      %s179 = scalar_select %p176, %s177, %s178
      %p182 = pneg %p176
      %p183 = scmp.eq.s32.totalorder %s25, 3
      %p184 = por %p182, %p183
      %p185 = scmp.ne.s32.totalorder %s177, %s180
      %p186 = scmp.eq.s32.totalorder %s25, 0
      %p187 = por %p185, %p186
      %p188 = scmp.ne.s32.totalorder %s177, %s180
      %p189 = scmp.eq.s32.totalorder %s30, 3
      %p190 = por %p188, %p189
      %p191 = scmp.ne.s32.totalorder %s180, %s181
      %p192 = scmp.eq.s32.totalorder %s30, 0
      %p193 = por %p191, %p192
      %p194 = scmp.ne.s32.totalorder %s180, %s181
      %p195 = scmp.eq.s32.totalorder %s31, 3
      %p196 = por %p194, %p195
      %p198 = scmp.ne.s32.totalorder %s181, %s197
      %p199 = scmp.eq.s32.totalorder %s31, 0
      %p200 = por %p198, %p199
      %s201 = ssub.s32 %s33, %s40
      %p202 = scmp.eq.s32.totalorder %s201, 0
      %s204 = sadd.s32 %s203, 1
      %s205 = scalar_select %p202, %s203, %s204
      %p208 = pneg %p202
      %p209 = scmp.eq.s32.totalorder %s25, 3
      %p210 = por %p208, %p209
      %p211 = scmp.ne.s32.totalorder %s203, %s206
      %p212 = scmp.eq.s32.totalorder %s25, 0
      %p213 = por %p211, %p212
      %p214 = scmp.ne.s32.totalorder %s203, %s206
      %p215 = scmp.eq.s32.totalorder %s30, 3
      %p216 = por %p214, %p215
      %p217 = scmp.ne.s32.totalorder %s206, %s207
      %p218 = scmp.eq.s32.totalorder %s30, 0
      %p219 = por %p217, %p218
      %p220 = scmp.ne.s32.totalorder %s206, %s207
      %p221 = scmp.eq.s32.totalorder %s31, 3
      %p222 = por %p220, %p221
      %p224 = scmp.ne.s32.totalorder %s207, %s223
      %p225 = scmp.eq.s32.totalorder %s31, 0
      %p226 = por %p224, %p225
      %s227 = ssub.s32 %s33, %s40
      %p228 = scmp.eq.s32.totalorder %s227, 0
      %s230 = sadd.s32 %s229, 1
      %s231 = scalar_select %p228, %s229, %s230
      %p234 = pneg %p228
      %p235 = scmp.eq.s32.totalorder %s25, 3
      %p236 = por %p234, %p235
      %p237 = scmp.ne.s32.totalorder %s229, %s232
      %p238 = scmp.eq.s32.totalorder %s25, 0
      %p239 = por %p237, %p238
      %p240 = scmp.ne.s32.totalorder %s229, %s232
      %p241 = scmp.eq.s32.totalorder %s30, 3
      %p242 = por %p240, %p241
      %p243 = scmp.ne.s32.totalorder %s232, %s233
      %p244 = scmp.eq.s32.totalorder %s30, 0
      %p245 = por %p243, %p244
      %p246 = scmp.ne.s32.totalorder %s232, %s233
      %p247 = scmp.eq.s32.totalorder %s31, 3
      %p248 = por %p246, %p247
      %p250 = scmp.ne.s32.totalorder %s233, %s249
      %p251 = scmp.eq.s32.totalorder %s31, 0
      %p252 = por %p250, %p251
      %s253 = ssub.s32 %s33, %s40
      %p254 = scmp.eq.s32.totalorder %s253, 0
      %s256 = sadd.s32 %s255, 1
      %s257 = scalar_select %p254, %s255, %s256
      %p260 = pneg %p254
      %p261 = scmp.eq.s32.totalorder %s25, 3
      %p262 = por %p260, %p261
      %p263 = scmp.ne.s32.totalorder %s255, %s258
      %p264 = scmp.eq.s32.totalorder %s25, 0
      %p265 = por %p263, %p264
      %p266 = scmp.ne.s32.totalorder %s255, %s258
      %p267 = scmp.eq.s32.totalorder %s30, 3
      %p268 = por %p266, %p267
      %p269 = scmp.ne.s32.totalorder %s258, %s259
      %p270 = scmp.eq.s32.totalorder %s30, 0
      %p271 = por %p269, %p270
      %p272 = scmp.ne.s32.totalorder %s258, %s259
      %p273 = scmp.eq.s32.totalorder %s31, 3
      %p274 = por %p272, %p273
      %p276 = scmp.ne.s32.totalorder %s259, %s275
      %p277 = scmp.eq.s32.totalorder %s31, 0
      %p278 = por %p276, %p277
      %s279 = ssub.s32 %s33, %s40
      %p280 = scmp.eq.s32.totalorder %s279, 0
      %s282 = sadd.s32 %s281, 1
      %s283 = scalar_select %p280, %s281, %s282
      %p286 = pneg %p280
      %p287 = scmp.eq.s32.totalorder %s25, 3
      %p288 = por %p286, %p287
      %p289 = scmp.ne.s32.totalorder %s281, %s284
      %p290 = scmp.eq.s32.totalorder %s25, 0
      %p291 = por %p289, %p290
      %p292 = scmp.ne.s32.totalorder %s281, %s284
      %p293 = scmp.eq.s32.totalorder %s30, 3
      %p294 = por %p292, %p293
      %p295 = scmp.ne.s32.totalorder %s284, %s285
      %p296 = scmp.eq.s32.totalorder %s30, 0
      %p297 = por %p295, %p296
      %p298 = scmp.ne.s32.totalorder %s284, %s285
      %p299 = scmp.eq.s32.totalorder %s31, 3
      %p300 = por %p298, %p299
      %p302 = scmp.ne.s32.totalorder %s285, %s301
      %p303 = scmp.eq.s32.totalorder %s31, 0
      %p304 = por %p302, %p303
      %s305 = ssub.s32 %s33, %s40
      %p306 = scmp.eq.s32.totalorder %s305, 0
      %s308 = sadd.s32 %s307, 1
      %s309 = scalar_select %p306, %s307, %s308
      %p312 = pneg %p306
      %p313 = scmp.eq.s32.totalorder %s25, 3
      %p314 = por %p312, %p313
      %p315 = scmp.ne.s32.totalorder %s307, %s310
      %p316 = scmp.eq.s32.totalorder %s25, 0
      %p317 = por %p315, %p316
      %p318 = scmp.ne.s32.totalorder %s307, %s310
      %p319 = scmp.eq.s32.totalorder %s30, 3
      %p320 = por %p318, %p319
      %p321 = scmp.ne.s32.totalorder %s310, %s311
      %p322 = scmp.eq.s32.totalorder %s30, 0
      %p323 = por %p321, %p322
      %p324 = scmp.ne.s32.totalorder %s310, %s311
      %p325 = scmp.eq.s32.totalorder %s31, 3
      %p326 = por %p324, %p325
      %p328 = scmp.ne.s32.totalorder %s311, %s327
      %p329 = scmp.eq.s32.totalorder %s31, 0
      %p330 = por %p328, %p329
      %s331 = ssub.s32 %s33, %s40
      %p332 = scmp.eq.s32.totalorder %s331, 0
      %s334 = sadd.s32 %s333, 1
      %s335 = scalar_select %p332, %s333, %s334
      %p338 = pneg %p332
      %p339 = scmp.eq.s32.totalorder %s25, 3
      %p340 = por %p338, %p339
      %p341 = scmp.ne.s32.totalorder %s333, %s336
      %p342 = scmp.eq.s32.totalorder %s25, 0
      %p343 = por %p341, %p342
      %p344 = scmp.ne.s32.totalorder %s333, %s336
      %p345 = scmp.eq.s32.totalorder %s30, 3
      %p346 = por %p344, %p345
      %p347 = scmp.ne.s32.totalorder %s336, %s337
      %p348 = scmp.eq.s32.totalorder %s30, 0
      %p349 = por %p347, %p348
      %p350 = scmp.ne.s32.totalorder %s336, %s337
      %p351 = scmp.eq.s32.totalorder %s31, 3
      %p352 = por %p350, %p351
      %p354 = scmp.ne.s32.totalorder %s337, %s353
      %p355 = scmp.eq.s32.totalorder %s31, 0
      %p356 = por %p354, %p355
      %s358 = sadd.s32 %s357, 1
      %p361 = scmp.eq.s32.totalorder %s25, 3
      %p362 = scmp.ne.s32.totalorder %s357, %s359
      %p363 = scmp.eq.s32.totalorder %s25, 0
      %p364 = por %p362, %p363
      %p365 = scmp.ne.s32.totalorder %s357, %s359
      %p366 = scmp.eq.s32.totalorder %s30, 3
      %p367 = por %p365, %p366
      %p368 = scmp.ne.s32.totalorder %s359, %s360
      %p369 = scmp.eq.s32.totalorder %s30, 0
      %p370 = por %p368, %p369
      %p371 = scmp.ne.s32.totalorder %s359, %s360
      %p372 = scmp.eq.s32.totalorder %s31, 3
      %p373 = por %p371, %p372
      %p375 = scmp.ne.s32.totalorder %s360, %s374
      %p376 = scmp.eq.s32.totalorder %s31, 0
      %p377 = por %p375, %p376
      %s379 = sadd.s32 %s378, 1
      %p382 = scmp.eq.s32.totalorder %s25, 3
      %p383 = scmp.ne.s32.totalorder %s378, %s380
      %p384 = scmp.eq.s32.totalorder %s25, 0
      %p385 = por %p383, %p384
      %p386 = scmp.ne.s32.totalorder %s378, %s380
      %p387 = scmp.eq.s32.totalorder %s30, 3
      %p388 = por %p386, %p387
      %p389 = scmp.ne.s32.totalorder %s380, %s381
      %p390 = scmp.eq.s32.totalorder %s30, 0
      %p391 = por %p389, %p390
      %p392 = scmp.ne.s32.totalorder %s380, %s381
      %p393 = scmp.eq.s32.totalorder %s31, 3
      %p394 = por %p392, %p393
      %p396 = scmp.ne.s32.totalorder %s381, %s395
      %p397 = scmp.eq.s32.totalorder %s31, 0
      %p398 = por %p396, %p397
      %s400 = sadd.s32 %s399, 1
      %p403 = scmp.eq.s32.totalorder %s25, 3
      %p404 = scmp.ne.s32.totalorder %s399, %s401
      %p405 = scmp.eq.s32.totalorder %s25, 0
      %p406 = por %p404, %p405
      %p407 = scmp.ne.s32.totalorder %s399, %s401
      %p408 = scmp.eq.s32.totalorder %s30, 3
      %p409 = por %p407, %p408
      %p410 = scmp.ne.s32.totalorder %s401, %s402
      %p411 = scmp.eq.s32.totalorder %s30, 0
      %p412 = por %p410, %p411
      %p413 = scmp.ne.s32.totalorder %s401, %s402
      %p414 = scmp.eq.s32.totalorder %s31, 3
      %p415 = por %p413, %p414
      %p417 = scmp.ne.s32.totalorder %s402, %s416
      %p418 = scmp.eq.s32.totalorder %s31, 0
      %p419 = por %p417, %p418
      %s421 = sadd.s32 %s420, 1
      %p424 = scmp.eq.s32.totalorder %s25, 3
      %p425 = scmp.ne.s32.totalorder %s420, %s422
      %p426 = scmp.eq.s32.totalorder %s25, 0
      %p427 = por %p425, %p426
      %p428 = scmp.ne.s32.totalorder %s420, %s422
      %p429 = scmp.eq.s32.totalorder %s30, 3
      %p430 = por %p428, %p429
      %p431 = scmp.ne.s32.totalorder %s422, %s423
      %p432 = scmp.eq.s32.totalorder %s30, 0
      %p433 = por %p431, %p432
      %p434 = scmp.ne.s32.totalorder %s422, %s423
      %p435 = scmp.eq.s32.totalorder %s31, 3
      %p436 = por %p434, %p435
      %p438 = scmp.ne.s32.totalorder %s423, %s437
      %p439 = scmp.eq.s32.totalorder %s31, 0
      %p440 = por %p438, %p439
      %s441 = ssub.s32 %s32, %s44
      %p442 = scmp.eq.s32.totalorder %s441, 0
      %s444 = sadd.s32 %s443, 1
      %s445 = scalar_select %p442, %s443, %s444
      %p448 = pneg %p442
      %p449 = scmp.eq.s32.totalorder %s25, 3
      %p450 = por %p448, %p449
      %p451 = scmp.ne.s32.totalorder %s443, %s446
      %p452 = scmp.eq.s32.totalorder %s25, 0
      %p453 = por %p451, %p452
      %p454 = scmp.ne.s32.totalorder %s443, %s446
      %p455 = scmp.eq.s32.totalorder %s30, 3
      %p456 = por %p454, %p455
      %p457 = scmp.ne.s32.totalorder %s446, %s447
      %p458 = scmp.eq.s32.totalorder %s30, 0
      %p459 = por %p457, %p458
      %p460 = scmp.ne.s32.totalorder %s446, %s447
      %p461 = scmp.eq.s32.totalorder %s31, 3
      %p462 = por %p460, %p461
      %p464 = scmp.ne.s32.totalorder %s447, %s463
      %p465 = scmp.eq.s32.totalorder %s31, 0
      %p466 = por %p464, %p465
      %p467 = scmp.le.s32.totalorder 1, %s25
      %p468 = scmp.lt.s32.totalorder %s25, 5
      %p469 = pnand %p467, %p468
      %p470 = pneg %p469
      // Predicated region
      $region9: #{transformer_classifier.1} parent=5 // pred_check
        _
      $region10: #{transformer_classifier.1} parent=5 // pred_check_branch
        %472 = sbr.rel (%p469) target = $region12
      $region11: #{transformer_classifier.1} parent=5 // pred_region
        %s473 = ssub.s32 %s25, 1
        // Predicated region
        $region13: #{transformer_classifier.1} parent=11 // pred_check
          %p474 = pneg %p370
        $region14: #{transformer_classifier.1} parent=11 // pred_check_branch
          %476 = sbr.rel (%p474) target = $region16
        $region15: #{transformer_classifier.1} parent=11 // pred_region
          _
        $region16: #{transformer_classifier.1} parent=11 // pred_fallthru
          _
        // Predicated region
        $region17: #{transformer_classifier.1} parent=11 // pred_check
          %p477 = pneg %p391
        $region18: #{transformer_classifier.1} parent=11 // pred_check_branch
          %479 = sbr.rel (%p477) target = $region20
        $region19: #{transformer_classifier.1} parent=11 // pred_region
          _
        $region20: #{transformer_classifier.1} parent=11 // pred_fallthru
          _
        // Predicated region
        $region21: #{transformer_classifier.1} parent=11 // pred_check
          %p480 = pneg %p412
        $region22: #{transformer_classifier.1} parent=11 // pred_check_branch
          %482 = sbr.rel (%p480) target = $region24
        $region23: #{transformer_classifier.1} parent=11 // pred_region
          _
        $region24: #{transformer_classifier.1} parent=11 // pred_fallthru
          _
        // Predicated region
        $region25: #{transformer_classifier.1} parent=11 // pred_check
          %p483 = pneg %p433
        $region26: #{transformer_classifier.1} parent=11 // pred_check_branch
          %485 = sbr.rel (%p483) target = $region28
        $region27: #{transformer_classifier.1} parent=11 // pred_region
          _
        $region28: #{transformer_classifier.1} parent=11 // pred_fallthru
          _
      $region12: #{transformer_classifier.1} parent=5 // pred_fallthru
        _
      %p486 = scmp.lt.s32.totalorder %s25, 4
      // Predicated region
      $region29: #{transformer_classifier.1} parent=5 // pred_check
        %p487 = pneg %p486
      $region30: #{transformer_classifier.1} parent=5 // pred_check_branch
        %489 = sbr.rel (%p487) target = $region32
      $region31: #{transformer_classifier.1} parent=5 // pred_region
        // Predicated region
        $region33: #{transformer_classifier.1} parent=31 // pred_check
          %p490 = pneg %p57
        $region34: #{transformer_classifier.1} parent=31 // pred_check_branch
          %492 = sbr.rel (%p490) target = $region36
        $region35: #{transformer_classifier.1} parent=31 // pred_region
          %p493 = scmp.lt.s32.totalorder %s32, 1
          %s494 = scalar_select %p493, %s32, 1
          %s495 = smul.addr %s494, 2
          %s496 = smul.addr %s495, 8
          %s497 = scalar_lea.vmem %s0, %s496
        $region36: #{transformer_classifier.1} parent=31 // pred_fallthru
          _
        // Predicated region
        $region37: #{transformer_classifier.1} parent=31 // pred_check
          %p498 = pneg %p83
        $region38: #{transformer_classifier.1} parent=31 // pred_check_branch
          %500 = sbr.rel (%p498) target = $region40
        $region39: #{transformer_classifier.1} parent=31 // pred_region
          %p501 = scmp.lt.s32.totalorder %s33, 1
          %s502 = scalar_select %p501, %s33, 1
          %s503 = scalar_lea.vmem %s1, %s502
        $region40: #{transformer_classifier.1} parent=31 // pred_fallthru
          _
        // Predicated region
        $region41: #{transformer_classifier.1} parent=31 // pred_check
          %p504 = pneg %p109
        $region42: #{transformer_classifier.1} parent=31 // pred_check_branch
          %506 = sbr.rel (%p504) target = $region44
        $region43: #{transformer_classifier.1} parent=31 // pred_region
          %p507 = scmp.lt.s32.totalorder %s33, 1
          %s508 = scalar_select %p507, %s33, 1
          %s509 = scalar_lea.vmem %s2, %s508
        $region44: #{transformer_classifier.1} parent=31 // pred_fallthru
          _
        // Predicated region
        $region45: #{transformer_classifier.1} parent=31 // pred_check
          %p510 = pneg %p135
        $region46: #{transformer_classifier.1} parent=31 // pred_check_branch
          %512 = sbr.rel (%p510) target = $region48
        $region47: #{transformer_classifier.1} parent=31 // pred_region
          %p513 = scmp.lt.s32.totalorder %s33, 1
          %s514 = scalar_select %p513, %s33, 1
          %s515 = smul.addr %s514, 4
          %s516 = smul.addr %s515, 4
          %s517 = scalar_lea.vmem %s3, %s516
        $region48: #{transformer_classifier.1} parent=31 // pred_fallthru
          _
        // Predicated region
        $region49: #{transformer_classifier.1} parent=31 // pred_check
          %p518 = pneg %p161
        $region50: #{transformer_classifier.1} parent=31 // pred_check_branch
          %520 = sbr.rel (%p518) target = $region52
        $region51: #{transformer_classifier.1} parent=31 // pred_region
          %p521 = scmp.lt.s32.totalorder %s33, 1
          %s522 = scalar_select %p521, %s33, 1
          %s523 = smul.addr %s522, 4
          %s524 = smul.addr %s523, 4
          %s525 = scalar_lea.vmem %s4, %s524
        $region52: #{transformer_classifier.1} parent=31 // pred_fallthru
          _
        // Predicated region
        $region53: #{transformer_classifier.1} parent=31 // pred_check
          %p526 = pneg %p187
        $region54: #{transformer_classifier.1} parent=31 // pred_check_branch
          %528 = sbr.rel (%p526) target = $region56
        $region55: #{transformer_classifier.1} parent=31 // pred_region
          %p529 = scmp.lt.s32.totalorder %s33, 1
          %s530 = scalar_select %p529, %s33, 1
          %s531 = scalar_lea.vmem %s5, %s530
        $region56: #{transformer_classifier.1} parent=31 // pred_fallthru
          _
        // Predicated region
        $region57: #{transformer_classifier.1} parent=31 // pred_check
          %p532 = pneg %p213
        $region58: #{transformer_classifier.1} parent=31 // pred_check_branch
          %534 = sbr.rel (%p532) target = $region60
        $region59: #{transformer_classifier.1} parent=31 // pred_region
          %p535 = scmp.lt.s32.totalorder %s33, 1
          %s536 = scalar_select %p535, %s33, 1
          %s537 = scalar_lea.vmem %s6, %s536
        $region60: #{transformer_classifier.1} parent=31 // pred_fallthru
          _
        // Predicated region
        $region61: #{transformer_classifier.1} parent=31 // pred_check
          %p538 = pneg %p239
        $region62: #{transformer_classifier.1} parent=31 // pred_check_branch
          %540 = sbr.rel (%p538) target = $region64
        $region63: #{transformer_classifier.1} parent=31 // pred_region
          %p541 = scmp.lt.s32.totalorder %s33, 1
          %s542 = scalar_select %p541, %s33, 1
          %s543 = scalar_lea.vmem %s7, %s542
        $region64: #{transformer_classifier.1} parent=31 // pred_fallthru
          _
        // Predicated region
        $region65: #{transformer_classifier.1} parent=31 // pred_check
          %p544 = pneg %p265
        $region66: #{transformer_classifier.1} parent=31 // pred_check_branch
          %546 = sbr.rel (%p544) target = $region68
        $region67: #{transformer_classifier.1} parent=31 // pred_region
          %p547 = scmp.lt.s32.totalorder %s33, 1
          %s548 = scalar_select %p547, %s33, 1
          %s549 = smul.addr %s548, 4
          %s550 = smul.addr %s549, 4
          %s551 = scalar_lea.vmem %s8, %s550
        $region68: #{transformer_classifier.1} parent=31 // pred_fallthru
          _
        // Predicated region
        $region69: #{transformer_classifier.1} parent=31 // pred_check
          %p552 = pneg %p291
        $region70: #{transformer_classifier.1} parent=31 // pred_check_branch
          %554 = sbr.rel (%p552) target = $region72
        $region71: #{transformer_classifier.1} parent=31 // pred_region
          %p555 = scmp.lt.s32.totalorder %s33, 1
          %s556 = scalar_select %p555, %s33, 1
          %s557 = scalar_lea.vmem %s9, %s556
        $region72: #{transformer_classifier.1} parent=31 // pred_fallthru
          _
        // Predicated region
        $region73: #{transformer_classifier.1} parent=31 // pred_check
          %p558 = pneg %p317
        $region74: #{transformer_classifier.1} parent=31 // pred_check_branch
          %560 = sbr.rel (%p558) target = $region76
        $region75: #{transformer_classifier.1} parent=31 // pred_region
          %p561 = scmp.lt.s32.totalorder %s33, 1
          %s562 = scalar_select %p561, %s33, 1
          %s563 = smul.addr %s562, 8
          %s564 = smul.addr %s563, 4
          %s565 = scalar_lea.vmem %s10, %s564
        $region76: #{transformer_classifier.1} parent=31 // pred_fallthru
          _
        // Predicated region
        $region77: #{transformer_classifier.1} parent=31 // pred_check
          %p566 = pneg %p343
        $region78: #{transformer_classifier.1} parent=31 // pred_check_branch
          %568 = sbr.rel (%p566) target = $region80
        $region79: #{transformer_classifier.1} parent=31 // pred_region
          %p569 = scmp.lt.s32.totalorder %s33, 1
          %s570 = scalar_select %p569, %s33, 1
          %s571 = scalar_lea.vmem %s11, %s570
        $region80: #{transformer_classifier.1} parent=31 // pred_fallthru
          _
      $region32: #{transformer_classifier.1} parent=5 // pred_fallthru
        _
      %p572 = scmp.le.s32.totalorder 1, %s25
      %p573 = scmp.lt.s32.totalorder %s25, 5
      %p574 = pnand %p572, %p573
      %p575 = pneg %p574
      // Predicated region
      $region81: #{transformer_classifier.1} parent=5 // pred_check
        _
      $region82: #{transformer_classifier.1} parent=5 // pred_check_branch
        %577 = sbr.rel (%p574) target = $region84
      $region83: #{transformer_classifier.1} parent=5 // pred_region
        %s578 = ssub.s32 %s25, 1
        %p579 = scmp.lt.s32.totalorder %s34, 1
        %s580 = scalar_select %p579, %s34, 1
        %s581 = smul.addr %s580, 2
        %s582 = smul.addr %s581, 8
        %s583 = scalar_lea.vmem %s0, %s582
        %p584 = pneg %p63
        %p585 = pneg %p60
        %p586 = scmp.lt.s32.totalorder %s35, 1
        %s587 = scalar_select %p586, %s35, 1
        %s588 = scalar_lea.vmem %s1, %s587
        %p589 = pneg %p89
        %p590 = pneg %p86
        %p591 = scmp.lt.s32.totalorder %s35, 1
        %s592 = scalar_select %p591, %s35, 1
        %s593 = scalar_lea.vmem %s2, %s592
        %p594 = pneg %p115
        %p595 = pneg %p112
        %p596 = scmp.lt.s32.totalorder %s35, 1
        %s597 = scalar_select %p596, %s35, 1
        %s598 = smul.addr %s597, 4
        %s599 = smul.addr %s598, 4
        %s600 = scalar_lea.vmem %s3, %s599
        %p601 = pneg %p141
        %p602 = pneg %p138
        %p603 = scmp.lt.s32.totalorder %s35, 1
        %s604 = scalar_select %p603, %s35, 1
        %s605 = smul.addr %s604, 4
        %s606 = smul.addr %s605, 4
        %s607 = scalar_lea.vmem %s4, %s606
        %p608 = pneg %p167
        %p609 = pneg %p164
        %p610 = scmp.lt.s32.totalorder %s35, 1
        %s611 = scalar_select %p610, %s35, 1
        %s612 = scalar_lea.vmem %s5, %s611
        %p613 = pneg %p193
        %p614 = pneg %p190
        %p615 = scmp.lt.s32.totalorder %s35, 1
        %s616 = scalar_select %p615, %s35, 1
        %s617 = scalar_lea.vmem %s6, %s616
        %p618 = pneg %p219
        %p619 = pneg %p216
        %p620 = scmp.lt.s32.totalorder %s35, 1
        %s621 = scalar_select %p620, %s35, 1
        %s622 = scalar_lea.vmem %s7, %s621
        %p623 = pneg %p245
        %p624 = pneg %p242
        %p625 = scmp.lt.s32.totalorder %s35, 1
        %s626 = scalar_select %p625, %s35, 1
        %s627 = smul.addr %s626, 4
        %s628 = smul.addr %s627, 4
        %s629 = scalar_lea.vmem %s8, %s628
        %p630 = pneg %p271
        %p631 = pneg %p268
        %p632 = scmp.lt.s32.totalorder %s35, 1
        %s633 = scalar_select %p632, %s35, 1
        %s634 = scalar_lea.vmem %s9, %s633
        %p635 = pneg %p297
        %p636 = pneg %p294
        %p637 = scmp.lt.s32.totalorder %s35, 1
        %s638 = scalar_select %p637, %s35, 1
        %s639 = smul.addr %s638, 8
        %s640 = smul.addr %s639, 4
        %s641 = scalar_lea.vmem %s10, %s640
        %p642 = pneg %p323
        %p643 = pneg %p320
        %p644 = scmp.lt.s32.totalorder %s35, 1
        %s645 = scalar_select %p644, %s35, 1
        %s646 = scalar_lea.vmem %s11, %s645
        %p647 = pneg %p349
        %p648 = pneg %p346
        %p649 = pneg %p370
        %p650 = pneg %p367
        %p651 = pneg %p391
        %p652 = pneg %p388
        %p653 = pneg %p412
        %p654 = pneg %p409
        %p655 = pneg %p433
        %p656 = pneg %p430
        %p657 = pneg %p459
        %p658 = pneg %p456
        %s659 = sand.u32 %s446, 1
        %s660 = scalar_lea.sflag [#allocation4], %s659
        %s661 = sand.u32 %s446, 1
        %s662 = scalar_lea.vmem [#allocation3], %s661
        %p663 = scmp.lt.s32.totalorder %s34, 1
        %s664 = scalar_select %p663, %s34, 1
        %s665 = smul.addr %s664, 2
        %s666 = smul.addr %s665, 8
        %s667 = scalar_lea.vmem %s0, %s666
        %p668 = scmp.lt.s32.totalorder %s35, 1
        %s669 = scalar_select %p668, %s35, 1
        %s670 = scalar_lea.vmem %s1, %s669
        %p671 = scmp.lt.s32.totalorder %s35, 1
        %s672 = scalar_select %p671, %s35, 1
        %s673 = scalar_lea.vmem %s2, %s672
        %p674 = scmp.lt.s32.totalorder %s35, 1
        %s675 = scalar_select %p674, %s35, 1
        %s676 = smul.addr %s675, 4
        %s677 = smul.addr %s676, 4
        %s678 = scalar_lea.vmem %s3, %s677
        %p679 = scmp.lt.s32.totalorder %s35, 1
        %s680 = scalar_select %p679, %s35, 1
        %s681 = smul.addr %s680, 4
        %s682 = smul.addr %s681, 4
        %s683 = scalar_lea.vmem %s4, %s682
        %p684 = scmp.lt.s32.totalorder %s35, 1
        %s685 = scalar_select %p684, %s35, 1
        %s686 = scalar_lea.vmem %s5, %s685
        %p687 = scmp.lt.s32.totalorder %s35, 1
        %s688 = scalar_select %p687, %s35, 1
        %s689 = scalar_lea.vmem %s6, %s688
        %p690 = scmp.lt.s32.totalorder %s35, 1
        %s691 = scalar_select %p690, %s35, 1
        %s692 = scalar_lea.vmem %s7, %s691
        %p693 = scmp.lt.s32.totalorder %s35, 1
        %s694 = scalar_select %p693, %s35, 1
        %s695 = smul.addr %s694, 4
        %s696 = smul.addr %s695, 4
        %s697 = scalar_lea.vmem %s8, %s696
        %p698 = scmp.lt.s32.totalorder %s35, 1
        %s699 = scalar_select %p698, %s35, 1
        %s700 = scalar_lea.vmem %s9, %s699
        %p701 = scmp.lt.s32.totalorder %s35, 1
        %s702 = scalar_select %p701, %s35, 1
        %s703 = smul.addr %s702, 8
        %s704 = smul.addr %s703, 4
        %s705 = scalar_lea.vmem %s10, %s704
        %p706 = scmp.lt.s32.totalorder %s35, 1
        %s707 = scalar_select %p706, %s35, 1
        %s708 = scalar_lea.vmem %s11, %s707
        %p710 = scmp.eq.s32.totalorder %s35, 0
        // Predicated region
        $region85: #{transformer_classifier.1} parent=83 // pred_check
          %p711 = pneg %p710
        $region86: #{transformer_classifier.1} parent=83 // pred_check_branch
          %713 = sbr.rel (%p711) target = $region88
        $region87: #{transformer_classifier.1} parent=83 // pred_region
          %v714 = vld [vmem:[%s667] sm:$0xff]
          %v715 = vld [vmem:[%s667 + $0x8] sm:$0xff]
          %vm716 = vcmask 261120
          %717 = vst.msk [vmem:[#allocation2] sm:$0xff] %vm716, %v714
          %718 = vst.msk [vmem:[#allocation2 + $0x8] sm:$0xff] %vm716, %v715
        $region88: #{transformer_classifier.1} parent=83 // pred_fallthru
          _
        %v719 = vld [vmem:[#allocation2] sm:$0xff]
        %v720 = vld [vmem:[#allocation2 + $0x8] sm:$0xff]
        %v721 = vld [vmem:[%s670] sm:$0x1]
        %v722 = vld [vmem:[%s673] sm:$0x1]
        %vm723 = vcmask 261120
        %v724 = vsel %vm723, %v719, 0.0
        %725 = vadd.xlane.f32.xlu0 %v724
        %v726 = vpop.xlane.xlu0 %725
        %v727 = vsel %vm723, %v720, 0.0
        %728 = vadd.xlane.f32.xlu0 %v727
        %v729 = vpop.xlane.xlu0 %728
        %v730 = vrcp.pop 32.0
        %v731 = vmul.f32 %v726, %v730
        %v732 = vmul.f32 %v729, %v730
        %v733 = vsub.f32 %v719, %v731
        %v734 = vsub.f32 %v720, %v732
        %v735 = vmul.f32 %v733, %v733
        %v736 = vmul.f32 %v734, %v734
        %v737 = vsel %vm723, %v735, 0.0
        %738 = vadd.xlane.f32.xlu0 %v737
        %v739 = vpop.xlane.xlu0 %738
        %v740 = vsel %vm723, %v736, 0.0
        %741 = vadd.xlane.f32.xlu0 %v740
        %v742 = vpop.xlane.xlu0 %741
        %v743 = vmul.f32 %v739, %v730
        %v744 = vmul.f32 %v742, %v730
        %v745 = vadd.f32 %v743, 1e-05
        %v746 = vadd.f32 %v744, 1e-05
        %v747 = vrsqrt.pop %v745
        %v748 = vrsqrt.pop %v746
        %v749 = vmul.f32 %v733, %v747
        %v750 = vmul.f32 %v734, %v748
        %v752 = vlaneseq
        %v753 = vshrl.u32 %v752, 7
        %v754 = vsub.s32 0, %v753
        %v755 = vrot.slane %v721, %v754
        %v757 = vmul.f32 %v749, %v755
        %v758 = vmul.f32 %v750, %v755
        %v760 = vlaneseq
        %v761 = vshrl.u32 %v760, 7
        %v762 = vsub.s32 0, %v761
        %v763 = vrot.slane %v722, %v762
        %v765 = vadd.f32 %v757, %v763
        %v766 = vadd.f32 %v758, %v763
        %v767 = vpack.c.bf16 %v766, %v765
        %v768 = vld [vmem:[%s678] sm:$0xf]
        %v769 = vld [vmem:[%s678 + $0x4] sm:$0xf]
        %v770 = vld [vmem:[%s678 + $0x8] sm:$0xf]
        %v771 = vld [vmem:[%s678 + $0xc] sm:$0xf]
        %v776 = vunpack.c.l.b16 %v768
        %v777 = vunpack.c.l.b16 %v769
        %v778 = vunpack.c.l.b16 %v770
        %v779 = vunpack.c.l.b16 %v771
        %v780 = vpack.c.b16 %v777, %v776
        %v781 = vpack.c.b16 %v779, %v778
        %v785 = vsel %vm723, %v767, 0
        %787 = vmatprep.subr.bf16.mxu0 0
        %788 = vmatpush1.bf16.msra.mxu0 0
        %789 = vmatprep.subr.bf16.mxu0 0
        %790 = vmatpush1.bf16.msra.mxu0 0
        %791 = vmatprep.subr.bf16.mxu0 0
        %792 = vmatpush1.bf16.msra.mxu0 0
        %793 = vmatprep.subr.bf16.mxu0 0
        %794 = vmatpush1.bf16.msra.mxu0 0
        %795 = vmatprep.subr.bf16.mxu0 0
        %796 = vmatpush1.bf16.msra.mxu0 0
        %797 = vmatprep.subr.bf16.mxu0 0
        %798 = vmatpush1.bf16.msra.mxu0 0
        %799 = vmatprep.subr.bf16.mxu0 0
        %800 = vmatpush1.bf16.msra.mxu0 %v781
        %801 = vmatprep.subr.bf16.mxu0 0
        %802 = vmatpush1.bf16.msra.mxu0 %v780
        %803 = vmatprep.subr.bf16.mxu0 0
        %804 = vmatpush2.bf16.msra.mxu0 0
        %805 = vmatprep.subr.bf16.mxu0 0
        %806 = vmatpush2.bf16.msra.mxu0 0
        %807 = vmatprep.subr.bf16.mxu0 0
        %808 = vmatpush2.bf16.msra.mxu0 0
        %809 = vmatprep.subr.bf16.mxu0 0
        %810 = vmatpush2.bf16.msra.mxu0 0
        %811 = vmatprep.subr.bf16.mxu0 0
        %812 = vmatpush2.bf16.msra.mxu0 0
        %813 = vmatprep.subr.bf16.mxu0 0
        %814 = vmatpush2.bf16.msra.mxu0 0
        %815 = vmatprep.subr.bf16.mxu0 0
        %816 = vmatpush2.bf16.msra.mxu0 0
        %817 = vmatprep.subr.bf16.mxu0 0
        %818 = vmatpush2.bf16.msra.mxu0 0
        %819 = vmatprep.mubr.bf16.mxu0 0
        %820 = vmatmul.mubr.bf16.gmra.mxu0 %v785
        %v821 = vpop.f32.mrf.mxu0
        %v822 = vadd.f32 0.0, %v821
        %v823 = vpop.f32.mrf.mxu0
        %v824 = vpop.f32.mrf.mxu0
        %v825 = vadd.f32 0.0, %v824
        %v826 = vpop.f32.mrf.mxu0
        %827 = vdwg.mxu0
        %v828 = vpack.c.bf16 %v825, %v822
        %v829 = vlaneseq
        %v830 = vand.u32 %v829, 127
        %vm831 = vcmp.lt.s32.totalorder %v830, 9
        %v832 = vsel %vm831, 0.0, -1e+30
        %834 = vrot.lane.b32.xlu0 %v828, 96
        %v835 = vpop.permute.xlu0 %834
        %vm836 = vcmask 64512
        %v838 = vsel %vm836, %v828, 0
        %v841 = vsel %vm836, %v835, 0
        %843 = vmatprep.subr.bf16.mxu0 0
        %844 = vmatpush1.bf16.xpose.msra.mxu0 0
        %845 = vmatprep.subr.bf16.mxu0 0
        %846 = vmatpush1.bf16.xpose.msra.mxu0 0
        %847 = vmatprep.subr.bf16.mxu0 0
        %848 = vmatpush1.bf16.xpose.msra.mxu0 0
        %849 = vmatprep.subr.bf16.mxu0 0
        %850 = vmatpush1.bf16.xpose.msra.mxu0 0
        %851 = vmatprep.subr.bf16.mxu0 0
        %852 = vmatpush1.bf16.xpose.msra.mxu0 0
        %853 = vmatprep.subr.bf16.mxu0 0
        %854 = vmatpush1.bf16.xpose.msra.mxu0 0
        %855 = vmatprep.subr.bf16.mxu0 0
        %856 = vmatpush1.bf16.xpose.msra.mxu0 0
        %857 = vmatprep.subr.bf16.mxu0 0
        %858 = vmatpush1.bf16.xpose.msra.mxu0 %v841
        %859 = vmatprep.subr.bf16.mxu0 0
        %860 = vmatpush2.bf16.xpose.msra.mxu0 0
        %861 = vmatprep.subr.bf16.mxu0 0
        %862 = vmatpush2.bf16.xpose.msra.mxu0 0
        %863 = vmatprep.subr.bf16.mxu0 0
        %864 = vmatpush2.bf16.xpose.msra.mxu0 0
        %865 = vmatprep.subr.bf16.mxu0 0
        %866 = vmatpush2.bf16.xpose.msra.mxu0 0
        %867 = vmatprep.subr.bf16.mxu0 0
        %868 = vmatpush2.bf16.xpose.msra.mxu0 0
        %869 = vmatprep.subr.bf16.mxu0 0
        %870 = vmatpush2.bf16.xpose.msra.mxu0 0
        %871 = vmatprep.subr.bf16.mxu0 0
        %872 = vmatpush2.bf16.xpose.msra.mxu0 0
        %873 = vmatprep.subr.bf16.mxu0 0
        %874 = vmatpush2.bf16.xpose.msra.mxu0 0
        %875 = vmatprep.mubr.bf16.mxu0 0
        %876 = vmatmul.mubr.bf16.gmra.mxu0 %v838
        %v877 = vpop.f32.mrf.mxu0
        %v878 = vadd.f32 0.0, %v877
        %v879 = vpop.f32.mrf.mxu0
        %v880 = vpop.f32.mrf.mxu0
        %v881 = vadd.f32 0.0, %v880
        %v882 = vpop.f32.mrf.mxu0
        %883 = vdwg.mxu0
        %v884 = vmul.f32 %v878, 0.35355338
        %v885 = vmul.f32 %v881, 0.35355338
        %v886 = vadd.f32 %v884, %v832
        %v887 = vadd.f32 %v885, %v832
        %vm888 = vcmask 130048
        %v889 = vsel %vm888, %v886, -inf
        %890 = vmax.xlane.f32.xlu0 %v889
        %v891 = vpop.xlane.xlu0 %890
        %v892 = vsel %vm888, %v887, -inf
        %893 = vmax.xlane.f32.xlu0 %v892
        %v894 = vpop.xlane.xlu0 %893
        %v895 = vsub.f32 %v886, %v891
        %v896 = vsub.f32 %v887, %v894
        %v897 = vmul.f32 %v895, 1.442695
        %v898 = vpow.pop %v897
        %v899 = vmul.f32 %v896, 1.442695
        %v900 = vpow.pop %v899
        %v901 = vsel %vm888, %v898, 0.0
        %902 = vadd.xlane.f32.xlu0 %v901
        %v903 = vpop.xlane.xlu0 %902
        %v904 = vsel %vm888, %v900, 0.0
        %905 = vadd.xlane.f32.xlu0 %v904
        %v906 = vpop.xlane.xlu0 %905
        %v907 = vrcp.pop %v903
        %v908 = vrcp.pop %v906
        %v909 = vmul.f32 %v898, %v907
        %v910 = vmul.f32 %v900, %v908
        %v911 = vpack.c.bf16 %v910, %v909
        %912 = vrot.lane.b32.xlu0 %v828, 64
        %v913 = vpop.permute.xlu0 %912
        %v916 = vsel %vm888, %v911, 0
        %918 = vmatprep.subr.bf16.mxu0 0
        %919 = vmatpush1.bf16.msra.mxu0 0
        %920 = vmatprep.subr.bf16.mxu0 0
        %921 = vmatpush1.bf16.msra.mxu0 0
        %922 = vmatprep.subr.bf16.mxu0 0
        %923 = vmatpush1.bf16.msra.mxu0 0
        %924 = vmatprep.subr.bf16.mxu0 0
        %925 = vmatpush1.bf16.msra.mxu0 0
        %926 = vmatprep.subr.bf16.mxu0 0
        %927 = vmatpush1.bf16.msra.mxu0 0
        %928 = vmatprep.subr.bf16.mxu0 0
        %929 = vmatpush1.bf16.msra.mxu0 0
        %930 = vmatprep.subr.bf16.mxu0 0
        %931 = vmatpush1.bf16.msra.mxu0 0
        %932 = vmatprep.subr.bf16.mxu0 0
        %933 = vmatpush1.bf16.msra.mxu0 %v913
        %934 = vmatprep.subr.bf16.mxu0 0
        %935 = vmatpush2.bf16.msra.mxu0 0
        %936 = vmatprep.subr.bf16.mxu0 0
        %937 = vmatpush2.bf16.msra.mxu0 0
        %938 = vmatprep.subr.bf16.mxu0 0
        %939 = vmatpush2.bf16.msra.mxu0 0
        %940 = vmatprep.subr.bf16.mxu0 0
        %941 = vmatpush2.bf16.msra.mxu0 0
        %942 = vmatprep.subr.bf16.mxu0 0
        %943 = vmatpush2.bf16.msra.mxu0 0
        %944 = vmatprep.subr.bf16.mxu0 0
        %945 = vmatpush2.bf16.msra.mxu0 0
        %946 = vmatprep.subr.bf16.mxu0 0
        %947 = vmatpush2.bf16.msra.mxu0 0
        %948 = vmatprep.subr.bf16.mxu0 0
        %949 = vmatpush2.bf16.msra.mxu0 0
        %950 = vmatprep.mubr.bf16.mxu0 0
        %951 = vmatmul.mubr.bf16.gmra.mxu0 %v916
        %v952 = vpop.f32.mrf.mxu0
        %v953 = vadd.f32 0.0, %v952
        %v954 = vpop.f32.mrf.mxu0
        %v955 = vpop.f32.mrf.mxu0
        %v956 = vadd.f32 0.0, %v955
        %v957 = vpop.f32.mrf.mxu0
        %958 = vdwg.mxu0
        %v959 = vpack.c.bf16 %v956, %v953
        %v960 = vld [vmem:[%s683] sm:$0xf]
        %961 = vrot.lane.b32.xlu0 %v828, 120
        %v962 = vpop.permute.xlu0 %961
        %963 = vrot.lane.b32.xlu0 %v828, 88
        %v964 = vpop.permute.xlu0 %963
        %v966 = vsel %vm836, %v962, 0
        %v969 = vsel %vm836, %v964, 0
        %971 = vmatprep.subr.bf16.mxu0 0
        %972 = vmatpush1.bf16.xpose.msra.mxu0 0
        %973 = vmatprep.subr.bf16.mxu0 0
        %974 = vmatpush1.bf16.xpose.msra.mxu0 0
        %975 = vmatprep.subr.bf16.mxu0 0
        %976 = vmatpush1.bf16.xpose.msra.mxu0 0
        %977 = vmatprep.subr.bf16.mxu0 0
        %978 = vmatpush1.bf16.xpose.msra.mxu0 0
        %979 = vmatprep.subr.bf16.mxu0 0
        %980 = vmatpush1.bf16.xpose.msra.mxu0 0
        %981 = vmatprep.subr.bf16.mxu0 0
        %982 = vmatpush1.bf16.xpose.msra.mxu0 0
        %983 = vmatprep.subr.bf16.mxu0 0
        %984 = vmatpush1.bf16.xpose.msra.mxu0 0
        %985 = vmatprep.subr.bf16.mxu0 0
        %986 = vmatpush1.bf16.xpose.msra.mxu0 %v969
        %987 = vmatprep.subr.bf16.mxu0 0
        %988 = vmatpush2.bf16.xpose.msra.mxu0 0
        %989 = vmatprep.subr.bf16.mxu0 0
        %990 = vmatpush2.bf16.xpose.msra.mxu0 0
        %991 = vmatprep.subr.bf16.mxu0 0
        %992 = vmatpush2.bf16.xpose.msra.mxu0 0
        %993 = vmatprep.subr.bf16.mxu0 0
        %994 = vmatpush2.bf16.xpose.msra.mxu0 0
        %995 = vmatprep.subr.bf16.mxu0 0
        %996 = vmatpush2.bf16.xpose.msra.mxu0 0
        %997 = vmatprep.subr.bf16.mxu0 0
        %998 = vmatpush2.bf16.xpose.msra.mxu0 0
        %999 = vmatprep.subr.bf16.mxu0 0
        %1000 = vmatpush2.bf16.xpose.msra.mxu0 0
        %1001 = vmatprep.subr.bf16.mxu0 0
        %1002 = vmatpush2.bf16.xpose.msra.mxu0 0
        %1003 = vmatprep.mubr.bf16.mxu0 0
        %1004 = vmatmul.mubr.bf16.gmra.mxu0 %v966
        %v1005 = vpop.f32.mrf.mxu0
        %v1006 = vadd.f32 0.0, %v1005
        %v1007 = vpop.f32.mrf.mxu0
        %v1008 = vpop.f32.mrf.mxu0
        %v1009 = vadd.f32 0.0, %v1008
        %v1010 = vpop.f32.mrf.mxu0
        %1011 = vdwg.mxu0
        %v1012 = vmul.f32 %v1006, 0.35355338
        %v1013 = vmul.f32 %v1009, 0.35355338
        %v1014 = vadd.f32 %v1012, %v832
        %v1015 = vadd.f32 %v1013, %v832
        %v1016 = vsel %vm888, %v1014, -inf
        %1017 = vmax.xlane.f32.xlu0 %v1016
        %v1018 = vpop.xlane.xlu0 %1017
        %v1019 = vsel %vm888, %v1015, -inf
        %1020 = vmax.xlane.f32.xlu0 %v1019
        %v1021 = vpop.xlane.xlu0 %1020
        %v1022 = vsub.f32 %v1014, %v1018
        %v1023 = vsub.f32 %v1015, %v1021
        %v1024 = vmul.f32 %v1022, 1.442695
        %v1025 = vpow.pop %v1024
        %v1026 = vmul.f32 %v1023, 1.442695
        %v1027 = vpow.pop %v1026
        %v1028 = vsel %vm888, %v1025, 0.0
        %1029 = vadd.xlane.f32.xlu0 %v1028
        %v1030 = vpop.xlane.xlu0 %1029
        %v1031 = vsel %vm888, %v1027, 0.0
        %1032 = vadd.xlane.f32.xlu0 %v1031
        %v1033 = vpop.xlane.xlu0 %1032
        %v1034 = vrcp.pop %v1030
        %v1035 = vrcp.pop %v1033
        %v1036 = vmul.f32 %v1025, %v1034
        %v1037 = vmul.f32 %v1027, %v1035
        %v1038 = vpack.c.bf16 %v1037, %v1036
        %1039 = vrot.lane.b32.xlu0 %v828, 56
        %v1040 = vpop.permute.xlu0 %1039
        %v1043 = vsel %vm888, %v1038, 0
        %1045 = vmatprep.subr.bf16.mxu0 0
        %1046 = vmatpush1.bf16.msra.mxu0 0
        %1047 = vmatprep.subr.bf16.mxu0 0
        %1048 = vmatpush1.bf16.msra.mxu0 0
        %1049 = vmatprep.subr.bf16.mxu0 0
        %1050 = vmatpush1.bf16.msra.mxu0 0
        %1051 = vmatprep.subr.bf16.mxu0 0
        %1052 = vmatpush1.bf16.msra.mxu0 0
        %1053 = vmatprep.subr.bf16.mxu0 0
        %1054 = vmatpush1.bf16.msra.mxu0 0
        %1055 = vmatprep.subr.bf16.mxu0 0
        %1056 = vmatpush1.bf16.msra.mxu0 0
        %1057 = vmatprep.subr.bf16.mxu0 0
        %1058 = vmatpush1.bf16.msra.mxu0 0
        %1059 = vmatprep.subr.bf16.mxu0 0
        %1060 = vmatpush1.bf16.msra.mxu0 %v1040
        %1061 = vmatprep.subr.bf16.mxu0 0
        %1062 = vmatpush2.bf16.msra.mxu0 0
        %1063 = vmatprep.subr.bf16.mxu0 0
        %1064 = vmatpush2.bf16.msra.mxu0 0
        %1065 = vmatprep.subr.bf16.mxu0 0
        %1066 = vmatpush2.bf16.msra.mxu0 0
        %1067 = vmatprep.subr.bf16.mxu0 0
        %1068 = vmatpush2.bf16.msra.mxu0 0
        %1069 = vmatprep.subr.bf16.mxu0 0
        %1070 = vmatpush2.bf16.msra.mxu0 0
        %1071 = vmatprep.subr.bf16.mxu0 0
        %1072 = vmatpush2.bf16.msra.mxu0 0
        %1073 = vmatprep.subr.bf16.mxu0 0
        %1074 = vmatpush2.bf16.msra.mxu0 0
        %1075 = vmatprep.subr.bf16.mxu0 0
        %1076 = vmatpush2.bf16.msra.mxu0 0
        %1077 = vmatprep.mubr.bf16.mxu0 0
        %1078 = vmatmul.mubr.bf16.gmra.mxu0 %v1043
        %v1079 = vpop.f32.mrf.mxu0
        %v1080 = vadd.f32 0.0, %v1079
        %v1081 = vpop.f32.mrf.mxu0
        %v1082 = vpop.f32.mrf.mxu0
        %v1083 = vadd.f32 0.0, %v1082
        %v1084 = vpop.f32.mrf.mxu0
        %1085 = vdwg.mxu0
        %v1086 = vpack.c.bf16 %v1083, %v1080
        %v1087 = vld [vmem:[%s683 + $0x4] sm:$0xf]
        %v1089 = vsel %vm836, %v1086, 0
        %vm1091 = vcmask 1043456
        %v1093 = vsel %vm1091, %v1087, 0
        %1095 = vmatprep.subr.bf16.mxu0 0
        %1096 = vmatpush1.bf16.msra.mxu0 0
        %1097 = vmatprep.subr.bf16.mxu0 0
        %1098 = vmatpush1.bf16.msra.mxu0 0
        %1099 = vmatprep.subr.bf16.mxu0 0
        %1100 = vmatpush1.bf16.msra.mxu0 0
        %1101 = vmatprep.subr.bf16.mxu0 0
        %1102 = vmatpush1.bf16.msra.mxu0 0
        %1103 = vmatprep.subr.bf16.mxu0 0
        %1104 = vmatpush1.bf16.msra.mxu0 0
        %1105 = vmatprep.subr.bf16.mxu0 0
        %1106 = vmatpush1.bf16.msra.mxu0 0
        %1107 = vmatprep.subr.bf16.mxu0 0
        %1108 = vmatpush1.bf16.msra.mxu0 0
        %1109 = vmatprep.subr.bf16.mxu0 0
        %1110 = vmatpush1.bf16.msra.mxu0 %v1093
        %1111 = vmatprep.subr.bf16.mxu0 0
        %1112 = vmatpush2.bf16.msra.mxu0 0
        %1113 = vmatprep.subr.bf16.mxu0 0
        %1114 = vmatpush2.bf16.msra.mxu0 0
        %1115 = vmatprep.subr.bf16.mxu0 0
        %1116 = vmatpush2.bf16.msra.mxu0 0
        %1117 = vmatprep.subr.bf16.mxu0 0
        %1118 = vmatpush2.bf16.msra.mxu0 0
        %1119 = vmatprep.subr.bf16.mxu0 0
        %1120 = vmatpush2.bf16.msra.mxu0 0
        %1121 = vmatprep.subr.bf16.mxu0 0
        %1122 = vmatpush2.bf16.msra.mxu0 0
        %1123 = vmatprep.subr.bf16.mxu0 0
        %1124 = vmatpush2.bf16.msra.mxu0 0
        %1125 = vmatprep.subr.bf16.mxu0 0
        %1126 = vmatpush2.bf16.msra.mxu0 0
        %1127 = vmatprep.mubr.bf16.mxu0 0
        %1128 = vmatmul.mubr.bf16.gmra.mxu0 %v1089
        %v1129 = vpop.f32.mrf.mxu0
        %v1130 = vadd.f32 0.0, %v1129
        %v1131 = vpop.f32.mrf.mxu0
        %v1132 = vpop.f32.mrf.mxu0
        %v1133 = vadd.f32 0.0, %v1132
        %v1134 = vpop.f32.mrf.mxu0
        %1135 = vdwg.mxu0
        %v1137 = vsel %vm836, %v959, 0
        %v1140 = vsel %vm1091, %v960, 0
        %1142 = vmatprep.subr.bf16.mxu0 0
        %1143 = vmatpush1.bf16.msra.mxu0 0
        %1144 = vmatprep.subr.bf16.mxu0 0
        %1145 = vmatpush1.bf16.msra.mxu0 0
        %1146 = vmatprep.subr.bf16.mxu0 0
        %1147 = vmatpush1.bf16.msra.mxu0 0
        %1148 = vmatprep.subr.bf16.mxu0 0
        %1149 = vmatpush1.bf16.msra.mxu0 0
        %1150 = vmatprep.subr.bf16.mxu0 0
        %1151 = vmatpush1.bf16.msra.mxu0 0
        %1152 = vmatprep.subr.bf16.mxu0 0
        %1153 = vmatpush1.bf16.msra.mxu0 0
        %1154 = vmatprep.subr.bf16.mxu0 0
        %1155 = vmatpush1.bf16.msra.mxu0 0
        %1156 = vmatprep.subr.bf16.mxu0 0
        %1157 = vmatpush1.bf16.msra.mxu0 %v1140
        %1158 = vmatprep.subr.bf16.mxu0 0
        %1159 = vmatpush2.bf16.msra.mxu0 0
        %1160 = vmatprep.subr.bf16.mxu0 0
        %1161 = vmatpush2.bf16.msra.mxu0 0
        %1162 = vmatprep.subr.bf16.mxu0 0
        %1163 = vmatpush2.bf16.msra.mxu0 0
        %1164 = vmatprep.subr.bf16.mxu0 0
        %1165 = vmatpush2.bf16.msra.mxu0 0
        %1166 = vmatprep.subr.bf16.mxu0 0
        %1167 = vmatpush2.bf16.msra.mxu0 0
        %1168 = vmatprep.subr.bf16.mxu0 0
        %1169 = vmatpush2.bf16.msra.mxu0 0
        %1170 = vmatprep.subr.bf16.mxu0 0
        %1171 = vmatpush2.bf16.msra.mxu0 0
        %1172 = vmatprep.subr.bf16.mxu0 0
        %1173 = vmatpush2.bf16.msra.mxu0 0
        %1174 = vmatprep.mubr.bf16.mxu0 0
        %1175 = vmatmul.mubr.bf16.gmra.mxu0 %v1137
        %v1176 = vpop.f32.mrf.mxu0
        %v1177 = vadd.f32 %v1130, %v1176
        %v1178 = vpop.f32.mrf.mxu0
        %v1179 = vpop.f32.mrf.mxu0
        %v1180 = vadd.f32 %v1133, %v1179
        %v1181 = vpop.f32.mrf.mxu0
        %1182 = vdwg.mxu0
        %1183 = vrot.lane.b32.xlu0 %v828, 112
        %v1184 = vpop.permute.xlu0 %1183
        %1185 = vrot.lane.b32.xlu0 %v828, 80
        %v1186 = vpop.permute.xlu0 %1185
        %v1188 = vsel %vm836, %v1184, 0
        %v1191 = vsel %vm836, %v1186, 0
        %1193 = vmatprep.subr.bf16.mxu0 0
        %1194 = vmatpush1.bf16.xpose.msra.mxu0 0
        %1195 = vmatprep.subr.bf16.mxu0 0
        %1196 = vmatpush1.bf16.xpose.msra.mxu0 0
        %1197 = vmatprep.subr.bf16.mxu0 0
        %1198 = vmatpush1.bf16.xpose.msra.mxu0 0
        %1199 = vmatprep.subr.bf16.mxu0 0
        %1200 = vmatpush1.bf16.xpose.msra.mxu0 0
        %1201 = vmatprep.subr.bf16.mxu0 0
        %1202 = vmatpush1.bf16.xpose.msra.mxu0 0
        %1203 = vmatprep.subr.bf16.mxu0 0
        %1204 = vmatpush1.bf16.xpose.msra.mxu0 0
        %1205 = vmatprep.subr.bf16.mxu0 0
        %1206 = vmatpush1.bf16.xpose.msra.mxu0 0
        %1207 = vmatprep.subr.bf16.mxu0 0
        %1208 = vmatpush1.bf16.xpose.msra.mxu0 %v1191
        %1209 = vmatprep.subr.bf16.mxu0 0
        %1210 = vmatpush2.bf16.xpose.msra.mxu0 0
        %1211 = vmatprep.subr.bf16.mxu0 0
        %1212 = vmatpush2.bf16.xpose.msra.mxu0 0
        %1213 = vmatprep.subr.bf16.mxu0 0
        %1214 = vmatpush2.bf16.xpose.msra.mxu0 0
        %1215 = vmatprep.subr.bf16.mxu0 0
        %1216 = vmatpush2.bf16.xpose.msra.mxu0 0
        %1217 = vmatprep.subr.bf16.mxu0 0
        %1218 = vmatpush2.bf16.xpose.msra.mxu0 0
        %1219 = vmatprep.subr.bf16.mxu0 0
        %1220 = vmatpush2.bf16.xpose.msra.mxu0 0
        %1221 = vmatprep.subr.bf16.mxu0 0
        %1222 = vmatpush2.bf16.xpose.msra.mxu0 0
        %1223 = vmatprep.subr.bf16.mxu0 0
        %1224 = vmatpush2.bf16.xpose.msra.mxu0 0
        %1225 = vmatprep.mubr.bf16.mxu0 0
        %1226 = vmatmul.mubr.bf16.gmra.mxu0 %v1188
        %v1227 = vpop.f32.mrf.mxu0
        %v1228 = vadd.f32 0.0, %v1227
        %v1229 = vpop.f32.mrf.mxu0
        %v1230 = vpop.f32.mrf.mxu0
        %v1231 = vadd.f32 0.0, %v1230
        %v1232 = vpop.f32.mrf.mxu0
        %1233 = vdwg.mxu0
        %v1234 = vmul.f32 %v1228, 0.35355338
        %v1235 = vmul.f32 %v1231, 0.35355338
        %v1236 = vadd.f32 %v1234, %v832
        %v1237 = vadd.f32 %v1235, %v832
        %v1238 = vsel %vm888, %v1236, -inf
        %1239 = vmax.xlane.f32.xlu0 %v1238
        %v1240 = vpop.xlane.xlu0 %1239
        %v1241 = vsel %vm888, %v1237, -inf
        %1242 = vmax.xlane.f32.xlu0 %v1241
        %v1243 = vpop.xlane.xlu0 %1242
        %v1244 = vsub.f32 %v1236, %v1240
        %v1245 = vsub.f32 %v1237, %v1243
        %v1246 = vmul.f32 %v1244, 1.442695
        %v1247 = vpow.pop %v1246
        %v1248 = vmul.f32 %v1245, 1.442695
        %v1249 = vpow.pop %v1248
        %v1250 = vsel %vm888, %v1247, 0.0
        %1251 = vadd.xlane.f32.xlu0 %v1250
        %v1252 = vpop.xlane.xlu0 %1251
        %v1253 = vsel %vm888, %v1249, 0.0
        %1254 = vadd.xlane.f32.xlu0 %v1253
        %v1255 = vpop.xlane.xlu0 %1254
        %v1256 = vrcp.pop %v1252
        %v1257 = vrcp.pop %v1255
        %v1258 = vmul.f32 %v1247, %v1256
        %v1259 = vmul.f32 %v1249, %v1257
        %v1260 = vpack.c.bf16 %v1259, %v1258
        %1261 = vrot.lane.b32.xlu0 %v828, 48
        %v1262 = vpop.permute.xlu0 %1261
        %v1265 = vsel %vm888, %v1260, 0
        %1267 = vmatprep.subr.bf16.mxu0 0
        %1268 = vmatpush1.bf16.msra.mxu0 0
        %1269 = vmatprep.subr.bf16.mxu0 0
        %1270 = vmatpush1.bf16.msra.mxu0 0
        %1271 = vmatprep.subr.bf16.mxu0 0
        %1272 = vmatpush1.bf16.msra.mxu0 0
        %1273 = vmatprep.subr.bf16.mxu0 0
        %1274 = vmatpush1.bf16.msra.mxu0 0
        %1275 = vmatprep.subr.bf16.mxu0 0
        %1276 = vmatpush1.bf16.msra.mxu0 0
        %1277 = vmatprep.subr.bf16.mxu0 0
        %1278 = vmatpush1.bf16.msra.mxu0 0
        %1279 = vmatprep.subr.bf16.mxu0 0
        %1280 = vmatpush1.bf16.msra.mxu0 0
        %1281 = vmatprep.subr.bf16.mxu0 0
        %1282 = vmatpush1.bf16.msra.mxu0 %v1262
        %1283 = vmatprep.subr.bf16.mxu0 0
        %1284 = vmatpush2.bf16.msra.mxu0 0
        %1285 = vmatprep.subr.bf16.mxu0 0
        %1286 = vmatpush2.bf16.msra.mxu0 0
        %1287 = vmatprep.subr.bf16.mxu0 0
        %1288 = vmatpush2.bf16.msra.mxu0 0
        %1289 = vmatprep.subr.bf16.mxu0 0
        %1290 = vmatpush2.bf16.msra.mxu0 0
        %1291 = vmatprep.subr.bf16.mxu0 0
        %1292 = vmatpush2.bf16.msra.mxu0 0
        %1293 = vmatprep.subr.bf16.mxu0 0
        %1294 = vmatpush2.bf16.msra.mxu0 0
        %1295 = vmatprep.subr.bf16.mxu0 0
        %1296 = vmatpush2.bf16.msra.mxu0 0
        %1297 = vmatprep.subr.bf16.mxu0 0
        %1298 = vmatpush2.bf16.msra.mxu0 0
        %1299 = vmatprep.mubr.bf16.mxu0 0
        %1300 = vmatmul.mubr.bf16.gmra.mxu0 %v1265
        %v1301 = vpop.f32.mrf.mxu0
        %v1302 = vadd.f32 0.0, %v1301
        %v1303 = vpop.f32.mrf.mxu0
        %v1304 = vpop.f32.mrf.mxu0
        %v1305 = vadd.f32 0.0, %v1304
        %v1306 = vpop.f32.mrf.mxu0
        %1307 = vdwg.mxu0
        %v1308 = vpack.c.bf16 %v1305, %v1302
        %v1309 = vld [vmem:[%s683 + $0x8] sm:$0xf]
        %v1311 = vsel %vm836, %v1308, 0
        %v1314 = vsel %vm1091, %v1309, 0
        %1316 = vmatprep.subr.bf16.mxu0 0
        %1317 = vmatpush1.bf16.msra.mxu0 0
        %1318 = vmatprep.subr.bf16.mxu0 0
        %1319 = vmatpush1.bf16.msra.mxu0 0
        %1320 = vmatprep.subr.bf16.mxu0 0
        %1321 = vmatpush1.bf16.msra.mxu0 0
        %1322 = vmatprep.subr.bf16.mxu0 0
        %1323 = vmatpush1.bf16.msra.mxu0 0
        %1324 = vmatprep.subr.bf16.mxu0 0
        %1325 = vmatpush1.bf16.msra.mxu0 0
        %1326 = vmatprep.subr.bf16.mxu0 0
        %1327 = vmatpush1.bf16.msra.mxu0 0
        %1328 = vmatprep.subr.bf16.mxu0 0
        %1329 = vmatpush1.bf16.msra.mxu0 0
        %1330 = vmatprep.subr.bf16.mxu0 0
        %1331 = vmatpush1.bf16.msra.mxu0 %v1314
        %1332 = vmatprep.subr.bf16.mxu0 0
        %1333 = vmatpush2.bf16.msra.mxu0 0
        %1334 = vmatprep.subr.bf16.mxu0 0
        %1335 = vmatpush2.bf16.msra.mxu0 0
        %1336 = vmatprep.subr.bf16.mxu0 0
        %1337 = vmatpush2.bf16.msra.mxu0 0
        %1338 = vmatprep.subr.bf16.mxu0 0
        %1339 = vmatpush2.bf16.msra.mxu0 0
        %1340 = vmatprep.subr.bf16.mxu0 0
        %1341 = vmatpush2.bf16.msra.mxu0 0
        %1342 = vmatprep.subr.bf16.mxu0 0
        %1343 = vmatpush2.bf16.msra.mxu0 0
        %1344 = vmatprep.subr.bf16.mxu0 0
        %1345 = vmatpush2.bf16.msra.mxu0 0
        %1346 = vmatprep.subr.bf16.mxu0 0
        %1347 = vmatpush2.bf16.msra.mxu0 0
        %1348 = vmatprep.mubr.bf16.mxu0 0
        %1349 = vmatmul.mubr.bf16.gmra.mxu0 %v1311
        %v1350 = vpop.f32.mrf.mxu0
        %v1351 = vadd.f32 0.0, %v1350
        %v1352 = vpop.f32.mrf.mxu0
        %v1353 = vpop.f32.mrf.mxu0
        %v1354 = vadd.f32 0.0, %v1353
        %v1355 = vpop.f32.mrf.mxu0
        %1356 = vdwg.mxu0
        %v1357 = vadd.f32 %v1177, %v1351
        %v1358 = vadd.f32 %v1180, %v1354
        %1359 = vrot.lane.b32.xlu0 %v828, 104
        %v1360 = vpop.permute.xlu0 %1359
        %1361 = vrot.lane.b32.xlu0 %v828, 72
        %v1362 = vpop.permute.xlu0 %1361
        %v1364 = vsel %vm836, %v1360, 0
        %v1367 = vsel %vm836, %v1362, 0
        %1369 = vmatprep.subr.bf16.mxu0 0
        %1370 = vmatpush1.bf16.xpose.msra.mxu0 0
        %1371 = vmatprep.subr.bf16.mxu0 0
        %1372 = vmatpush1.bf16.xpose.msra.mxu0 0
        %1373 = vmatprep.subr.bf16.mxu0 0
        %1374 = vmatpush1.bf16.xpose.msra.mxu0 0
        %1375 = vmatprep.subr.bf16.mxu0 0
        %1376 = vmatpush1.bf16.xpose.msra.mxu0 0
        %1377 = vmatprep.subr.bf16.mxu0 0
        %1378 = vmatpush1.bf16.xpose.msra.mxu0 0
        %1379 = vmatprep.subr.bf16.mxu0 0
        %1380 = vmatpush1.bf16.xpose.msra.mxu0 0
        %1381 = vmatprep.subr.bf16.mxu0 0
        %1382 = vmatpush1.bf16.xpose.msra.mxu0 0
        %1383 = vmatprep.subr.bf16.mxu0 0
        %1384 = vmatpush1.bf16.xpose.msra.mxu0 %v1367
        %1385 = vmatprep.subr.bf16.mxu0 0
        %1386 = vmatpush2.bf16.xpose.msra.mxu0 0
        %1387 = vmatprep.subr.bf16.mxu0 0
        %1388 = vmatpush2.bf16.xpose.msra.mxu0 0
        %1389 = vmatprep.subr.bf16.mxu0 0
        %1390 = vmatpush2.bf16.xpose.msra.mxu0 0
        %1391 = vmatprep.subr.bf16.mxu0 0
        %1392 = vmatpush2.bf16.xpose.msra.mxu0 0
        %1393 = vmatprep.subr.bf16.mxu0 0
        %1394 = vmatpush2.bf16.xpose.msra.mxu0 0
        %1395 = vmatprep.subr.bf16.mxu0 0
        %1396 = vmatpush2.bf16.xpose.msra.mxu0 0
        %1397 = vmatprep.subr.bf16.mxu0 0
        %1398 = vmatpush2.bf16.xpose.msra.mxu0 0
        %1399 = vmatprep.subr.bf16.mxu0 0
        %1400 = vmatpush2.bf16.xpose.msra.mxu0 0
        %1401 = vmatprep.mubr.bf16.mxu0 0
        %1402 = vmatmul.mubr.bf16.gmra.mxu0 %v1364
        %v1403 = vpop.f32.mrf.mxu0
        %v1404 = vadd.f32 0.0, %v1403
        %v1405 = vpop.f32.mrf.mxu0
        %v1406 = vpop.f32.mrf.mxu0
        %v1407 = vadd.f32 0.0, %v1406
        %v1408 = vpop.f32.mrf.mxu0
        %1409 = vdwg.mxu0
        %v1410 = vmul.f32 %v1404, 0.35355338
        %v1411 = vmul.f32 %v1407, 0.35355338
        %v1412 = vadd.f32 %v1410, %v832
        %v1413 = vadd.f32 %v1411, %v832
        %v1414 = vsel %vm888, %v1412, -inf
        %1415 = vmax.xlane.f32.xlu0 %v1414
        %v1416 = vpop.xlane.xlu0 %1415
        %v1417 = vsel %vm888, %v1413, -inf
        %1418 = vmax.xlane.f32.xlu0 %v1417
        %v1419 = vpop.xlane.xlu0 %1418
        %v1420 = vsub.f32 %v1412, %v1416
        %v1421 = vsub.f32 %v1413, %v1419
        %v1422 = vmul.f32 %v1420, 1.442695
        %v1423 = vpow.pop %v1422
        %v1424 = vmul.f32 %v1421, 1.442695
        %v1425 = vpow.pop %v1424
        %v1426 = vsel %vm888, %v1423, 0.0
        %1427 = vadd.xlane.f32.xlu0 %v1426
        %v1428 = vpop.xlane.xlu0 %1427
        %v1429 = vsel %vm888, %v1425, 0.0
        %1430 = vadd.xlane.f32.xlu0 %v1429
        %v1431 = vpop.xlane.xlu0 %1430
        %v1432 = vrcp.pop %v1428
        %v1433 = vrcp.pop %v1431
        %v1434 = vmul.f32 %v1423, %v1432
        %v1435 = vmul.f32 %v1425, %v1433
        %v1436 = vpack.c.bf16 %v1435, %v1434
        %1437 = vrot.lane.b32.xlu0 %v828, 40
        %v1438 = vpop.permute.xlu0 %1437
        %v1441 = vsel %vm888, %v1436, 0
        %1443 = vmatprep.subr.bf16.mxu0 0
        %1444 = vmatpush1.bf16.msra.mxu0 0
        %1445 = vmatprep.subr.bf16.mxu0 0
        %1446 = vmatpush1.bf16.msra.mxu0 0
        %1447 = vmatprep.subr.bf16.mxu0 0
        %1448 = vmatpush1.bf16.msra.mxu0 0
        %1449 = vmatprep.subr.bf16.mxu0 0
        %1450 = vmatpush1.bf16.msra.mxu0 0
        %1451 = vmatprep.subr.bf16.mxu0 0
        %1452 = vmatpush1.bf16.msra.mxu0 0
        %1453 = vmatprep.subr.bf16.mxu0 0
        %1454 = vmatpush1.bf16.msra.mxu0 0
        %1455 = vmatprep.subr.bf16.mxu0 0
        %1456 = vmatpush1.bf16.msra.mxu0 0
        %1457 = vmatprep.subr.bf16.mxu0 0
        %1458 = vmatpush1.bf16.msra.mxu0 %v1438
        %1459 = vmatprep.subr.bf16.mxu0 0
        %1460 = vmatpush2.bf16.msra.mxu0 0
        %1461 = vmatprep.subr.bf16.mxu0 0
        %1462 = vmatpush2.bf16.msra.mxu0 0
        %1463 = vmatprep.subr.bf16.mxu0 0
        %1464 = vmatpush2.bf16.msra.mxu0 0
        %1465 = vmatprep.subr.bf16.mxu0 0
        %1466 = vmatpush2.bf16.msra.mxu0 0
        %1467 = vmatprep.subr.bf16.mxu0 0
        %1468 = vmatpush2.bf16.msra.mxu0 0
        %1469 = vmatprep.subr.bf16.mxu0 0
        %1470 = vmatpush2.bf16.msra.mxu0 0
        %1471 = vmatprep.subr.bf16.mxu0 0
        %1472 = vmatpush2.bf16.msra.mxu0 0
        %1473 = vmatprep.subr.bf16.mxu0 0
        %1474 = vmatpush2.bf16.msra.mxu0 0
        %1475 = vmatprep.mubr.bf16.mxu0 0
        %1476 = vmatmul.mubr.bf16.gmra.mxu0 %v1441
        %v1477 = vpop.f32.mrf.mxu0
        %v1478 = vadd.f32 0.0, %v1477
        %v1479 = vpop.f32.mrf.mxu0
        %v1480 = vpop.f32.mrf.mxu0
        %v1481 = vadd.f32 0.0, %v1480
        %v1482 = vpop.f32.mrf.mxu0
        %1483 = vdwg.mxu0
        %v1484 = vpack.c.bf16 %v1481, %v1478
        %v1485 = vld [vmem:[%s683 + $0xc] sm:$0xf]
        %v1487 = vsel %vm836, %v1484, 0
        %v1490 = vsel %vm1091, %v1485, 0
        %1492 = vmatprep.subr.bf16.mxu0 0
        %1493 = vmatpush1.bf16.msra.mxu0 0
        %1494 = vmatprep.subr.bf16.mxu0 0
        %1495 = vmatpush1.bf16.msra.mxu0 0
        %1496 = vmatprep.subr.bf16.mxu0 0
        %1497 = vmatpush1.bf16.msra.mxu0 0
        %1498 = vmatprep.subr.bf16.mxu0 0
        %1499 = vmatpush1.bf16.msra.mxu0 0
        %1500 = vmatprep.subr.bf16.mxu0 0
        %1501 = vmatpush1.bf16.msra.mxu0 0
        %1502 = vmatprep.subr.bf16.mxu0 0
        %1503 = vmatpush1.bf16.msra.mxu0 0
        %1504 = vmatprep.subr.bf16.mxu0 0
        %1505 = vmatpush1.bf16.msra.mxu0 0
        %1506 = vmatprep.subr.bf16.mxu0 0
        %1507 = vmatpush1.bf16.msra.mxu0 %v1490
        %1508 = vmatprep.subr.bf16.mxu0 0
        %1509 = vmatpush2.bf16.msra.mxu0 0
        %1510 = vmatprep.subr.bf16.mxu0 0
        %1511 = vmatpush2.bf16.msra.mxu0 0
        %1512 = vmatprep.subr.bf16.mxu0 0
        %1513 = vmatpush2.bf16.msra.mxu0 0
        %1514 = vmatprep.subr.bf16.mxu0 0
        %1515 = vmatpush2.bf16.msra.mxu0 0
        %1516 = vmatprep.subr.bf16.mxu0 0
        %1517 = vmatpush2.bf16.msra.mxu0 0
        %1518 = vmatprep.subr.bf16.mxu0 0
        %1519 = vmatpush2.bf16.msra.mxu0 0
        %1520 = vmatprep.subr.bf16.mxu0 0
        %1521 = vmatpush2.bf16.msra.mxu0 0
        %1522 = vmatprep.subr.bf16.mxu0 0
        %1523 = vmatpush2.bf16.msra.mxu0 0
        %1524 = vmatprep.mubr.bf16.mxu0 0
        %1525 = vmatmul.mubr.bf16.gmra.mxu0 %v1487
        %v1526 = vpop.f32.mrf.mxu0
        %v1527 = vadd.f32 0.0, %v1526
        %v1528 = vpop.f32.mrf.mxu0
        %v1529 = vpop.f32.mrf.mxu0
        %v1530 = vadd.f32 0.0, %v1529
        %v1531 = vpop.f32.mrf.mxu0
        %1532 = vdwg.mxu0
        %v1533 = vadd.f32 %v1357, %v1527
        %v1534 = vadd.f32 %v1358, %v1530
        %v1535 = vadd.f32 %v719, %v1533
        %v1536 = vadd.f32 %v720, %v1534
        %v1537 = vld [vmem:[%s686] sm:$0x1]
        %v1539 = vlaneseq
        %v1540 = vshrl.u32 %v1539, 7
        %v1541 = vsub.s32 0, %v1540
        %v1542 = vrot.slane %v1537, %v1541
        %v1544 = vadd.f32 %v1535, %v1542
        %v1545 = vadd.f32 %v1536, %v1542
        %v1546 = vld [vmem:[%s689] sm:$0x1]
        %v1547 = vld [vmem:[%s692] sm:$0x1]
        %v1548 = vsel %vm723, %v1544, 0.0
        %1549 = vadd.xlane.f32.xlu0 %v1548
        %v1550 = vpop.xlane.xlu0 %1549
        %v1551 = vsel %vm723, %v1545, 0.0
        %1552 = vadd.xlane.f32.xlu0 %v1551
        %v1553 = vpop.xlane.xlu0 %1552
        %v1554 = vmul.f32 %v1550, %v730
        %v1555 = vmul.f32 %v1553, %v730
        %v1556 = vsub.f32 %v1544, %v1554
        %v1557 = vsub.f32 %v1545, %v1555
        %v1558 = vmul.f32 %v1556, %v1556
        %v1559 = vmul.f32 %v1557, %v1557
        %v1560 = vsel %vm723, %v1558, 0.0
        %1561 = vadd.xlane.f32.xlu0 %v1560
        %v1562 = vpop.xlane.xlu0 %1561
        %v1563 = vsel %vm723, %v1559, 0.0
        %1564 = vadd.xlane.f32.xlu0 %v1563
        %v1565 = vpop.xlane.xlu0 %1564
        %v1566 = vmul.f32 %v1562, %v730
        %v1567 = vmul.f32 %v1565, %v730
        %v1568 = vadd.f32 %v1566, 1e-05
        %v1569 = vadd.f32 %v1567, 1e-05
        %v1570 = vrsqrt.pop %v1568
        %v1571 = vrsqrt.pop %v1569
        %v1572 = vmul.f32 %v1556, %v1570
        %v1573 = vmul.f32 %v1557, %v1571
        %v1575 = vlaneseq
        %v1576 = vshrl.u32 %v1575, 7
        %v1577 = vsub.s32 0, %v1576
        %v1578 = vrot.slane %v1546, %v1577
        %v1580 = vmul.f32 %v1572, %v1578
        %v1581 = vmul.f32 %v1573, %v1578
        %v1583 = vlaneseq
        %v1584 = vshrl.u32 %v1583, 7
        %v1585 = vsub.s32 0, %v1584
        %v1586 = vrot.slane %v1547, %v1585
        %v1588 = vadd.f32 %v1580, %v1586
        %v1589 = vadd.f32 %v1581, %v1586
        %v1590 = vpack.c.bf16 %v1589, %v1588
        %v1591 = vld [vmem:[%s697] sm:$0xf]
        %v1592 = vld [vmem:[%s697 + $0x4] sm:$0xf]
        %v1593 = vld [vmem:[%s697 + $0x8] sm:$0xf]
        %v1594 = vld [vmem:[%s697 + $0xc] sm:$0xf]
        %v1595 = vld [vmem:[%s700] sm:$0x1]
        %v1597 = vlaneseq
        %v1598 = vshrl.u32 %v1597, 7
        %v1599 = vsub.s32 0, %v1598
        %v1600 = vrot.slane %v1595, %v1599
        %v1606 = vunpack.c.l.b16 %v1591
        %v1607 = vunpack.c.l.b16 %v1592
        %v1608 = vunpack.c.l.b16 %v1593
        %v1609 = vunpack.c.l.b16 %v1594
        %v1610 = vpack.c.b16 %v1607, %v1606
        %v1611 = vpack.c.b16 %v1609, %v1608
        %v1615 = vsel %vm723, %v1590, 0
        %1617 = vmatprep.subr.bf16.mxu0 0
        %1618 = vmatpush1.bf16.msra.mxu0 0
        %1619 = vmatprep.subr.bf16.mxu0 0
        %1620 = vmatpush1.bf16.msra.mxu0 0
        %1621 = vmatprep.subr.bf16.mxu0 0
        %1622 = vmatpush1.bf16.msra.mxu0 0
        %1623 = vmatprep.subr.bf16.mxu0 0
        %1624 = vmatpush1.bf16.msra.mxu0 0
        %1625 = vmatprep.subr.bf16.mxu0 0
        %1626 = vmatpush1.bf16.msra.mxu0 0
        %1627 = vmatprep.subr.bf16.mxu0 0
        %1628 = vmatpush1.bf16.msra.mxu0 0
        %1629 = vmatprep.subr.bf16.mxu0 0
        %1630 = vmatpush1.bf16.msra.mxu0 %v1611
        %1631 = vmatprep.subr.bf16.mxu0 0
        %1632 = vmatpush1.bf16.msra.mxu0 %v1610
        %1633 = vmatprep.subr.bf16.mxu0 0
        %1634 = vmatpush2.bf16.msra.mxu0 0
        %1635 = vmatprep.subr.bf16.mxu0 0
        %1636 = vmatpush2.bf16.msra.mxu0 0
        %1637 = vmatprep.subr.bf16.mxu0 0
        %1638 = vmatpush2.bf16.msra.mxu0 0
        %1639 = vmatprep.subr.bf16.mxu0 0
        %1640 = vmatpush2.bf16.msra.mxu0 0
        %1641 = vmatprep.subr.bf16.mxu0 0
        %1642 = vmatpush2.bf16.msra.mxu0 0
        %1643 = vmatprep.subr.bf16.mxu0 0
        %1644 = vmatpush2.bf16.msra.mxu0 0
        %1645 = vmatprep.subr.bf16.mxu0 0
        %1646 = vmatpush2.bf16.msra.mxu0 0
        %1647 = vmatprep.subr.bf16.mxu0 0
        %1648 = vmatpush2.bf16.msra.mxu0 0
        %1649 = vmatprep.mubr.bf16.mxu0 0
        %1650 = vmatmul.mubr.bf16.gmra.mxu0 %v1615
        %v1651 = vpop.f32.mrf.mxu0
        %v1652 = vadd.f32 %v1600, %v1651
        %v1653 = vpop.f32.mrf.mxu0
        %v1654 = vpop.f32.mrf.mxu0
        %v1655 = vadd.f32 %v1600, %v1654
        %v1656 = vpop.f32.mrf.mxu0
        %1657 = vdwg.mxu0
        %v1658 = vmul.f32 %v1652, 0.5
        %v1659 = vmul.f32 %v1655, 0.5
        %v1660 = vmul.f32 %v1652, 0.70710677
        %v1661 = vmul.f32 %v1655, 0.70710677
        %v1662 = verf.f32.pop %v1660
        %v1663 = verf.f32.pop %v1661
        %v1664 = vadd.f32 %v1662, 1.0
        %v1665 = vadd.f32 %v1663, 1.0
        %v1666 = vmul.f32 %v1658, %v1664
        %v1667 = vmul.f32 %v1659, %v1665
        %v1668 = vpack.c.bf16 %v1667, %v1666
        %v1669 = vld [vmem:[%s705] sm:$0xf]
        %v1670 = vld [vmem:[%s705 + $0x4] sm:$0xf]
        %v1671 = vld [vmem:[%s705 + $0x8] sm:$0xf]
        %v1672 = vld [vmem:[%s705 + $0xc] sm:$0xf]
        %v1673 = vld [vmem:[%s705 + $0x10] sm:$0xf]
        %v1674 = vld [vmem:[%s705 + $0x14] sm:$0xf]
        %v1675 = vld [vmem:[%s705 + $0x18] sm:$0xf]
        %v1676 = vld [vmem:[%s705 + $0x1c] sm:$0xf]
        %v1677 = vld [vmem:[%s708] sm:$0x1]
        %v1679 = vlaneseq
        %v1680 = vshrl.u32 %v1679, 7
        %v1681 = vsub.s32 0, %v1680
        %v1682 = vrot.slane %v1677, %v1681
        %v1692 = vunpack.c.l.b16 %v1669
        %v1693 = vunpack.c.l.b16 %v1670
        %v1694 = vunpack.c.l.b16 %v1671
        %v1695 = vunpack.c.l.b16 %v1672
        %v1696 = vunpack.c.l.b16 %v1673
        %v1697 = vunpack.c.l.b16 %v1674
        %v1698 = vunpack.c.l.b16 %v1675
        %v1699 = vunpack.c.l.b16 %v1676
        %v1700 = vpack.c.b16 %v1693, %v1692
        %v1701 = vpack.c.b16 %v1695, %v1694
        %v1702 = vpack.c.b16 %v1697, %v1696
        %v1703 = vpack.c.b16 %v1699, %v1698
        %vm1708 = vcmask 523264
        %v1710 = vsel %vm1708, %v1668, 0
        %1712 = vmatprep.subr.bf16.mxu0 0
        %1713 = vmatpush1.bf16.msra.mxu0 0
        %1714 = vmatprep.subr.bf16.mxu0 0
        %1715 = vmatpush1.bf16.msra.mxu0 0
        %1716 = vmatprep.subr.bf16.mxu0 0
        %1717 = vmatpush1.bf16.msra.mxu0 0
        %1718 = vmatprep.subr.bf16.mxu0 0
        %1719 = vmatpush1.bf16.msra.mxu0 0
        %1720 = vmatprep.subr.bf16.mxu0 0
        %1721 = vmatpush1.bf16.msra.mxu0 %v1703
        %1722 = vmatprep.subr.bf16.mxu0 0
        %1723 = vmatpush1.bf16.msra.mxu0 %v1702
        %1724 = vmatprep.subr.bf16.mxu0 0
        %1725 = vmatpush1.bf16.msra.mxu0 %v1701
        %1726 = vmatprep.subr.bf16.mxu0 0
        %1727 = vmatpush1.bf16.msra.mxu0 %v1700
        %1728 = vmatprep.subr.bf16.mxu0 0
        %1729 = vmatpush2.bf16.msra.mxu0 0
        %1730 = vmatprep.subr.bf16.mxu0 0
        %1731 = vmatpush2.bf16.msra.mxu0 0
        %1732 = vmatprep.subr.bf16.mxu0 0
        %1733 = vmatpush2.bf16.msra.mxu0 0
        %1734 = vmatprep.subr.bf16.mxu0 0
        %1735 = vmatpush2.bf16.msra.mxu0 0
        %1736 = vmatprep.subr.bf16.mxu0 0
        %1737 = vmatpush2.bf16.msra.mxu0 0
        %1738 = vmatprep.subr.bf16.mxu0 0
        %1739 = vmatpush2.bf16.msra.mxu0 0
        %1740 = vmatprep.subr.bf16.mxu0 0
        %1741 = vmatpush2.bf16.msra.mxu0 0
        %1742 = vmatprep.subr.bf16.mxu0 0
        %1743 = vmatpush2.bf16.msra.mxu0 0
        %1744 = vmatprep.mubr.bf16.mxu0 0
        %1745 = vmatmul.mubr.bf16.gmra.mxu0 %v1710
        %v1746 = vpop.f32.mrf.mxu0
        %v1747 = vadd.f32 %v1682, %v1746
        %v1748 = vpop.f32.mrf.mxu0
        %v1749 = vpop.f32.mrf.mxu0
        %v1750 = vadd.f32 %v1682, %v1749
        %v1751 = vpop.f32.mrf.mxu0
        %1752 = vdwg.mxu0
        %v1753 = vadd.f32 %v1544, %v1747
        %v1754 = vadd.f32 %v1545, %v1750
        %1755 = vst.msk [vmem:[#allocation2] sm:$0xff] %vm723, %v1753
        %1756 = vst.msk [vmem:[#allocation2 + $0x8] sm:$0xff] %vm723, %v1754
        %p1757 = scmp.eq.s32.totalorder %s35, 1
        // Predicated region
        $region89: #{transformer_classifier.1} parent=83 // pred_check
          %p1758 = pneg %p1757
        $region90: #{transformer_classifier.1} parent=83 // pred_check_branch
          %1760 = sbr.rel (%p1758) target = $region92
        $region91: #{transformer_classifier.1} parent=83 // pred_region
          %v1761 = vld [vmem:[%s12] sm:$0x1]
          %v1762 = vld [vmem:[%s13] sm:$0x1]
          %vm1763 = vcmask 253952
          %v1764 = vsel %vm1763, %v1753, 0.0
          %1765 = vadd.xlane.f32.xlu0 %v1764
          %v1766 = vpop.xlane.xlu0 %1765
          %v1767 = vmul.f32 %v1766, %v730
          %v1768 = vsub.f32 %v1753, %v1767
          %v1769 = vmul.f32 %v1768, %v1768
          %v1770 = vsel %vm1763, %v1769, 0.0
          %1771 = vadd.xlane.f32.xlu0 %v1770
          %v1772 = vpop.xlane.xlu0 %1771
          %v1773 = vmul.f32 %v1772, %v730
          %v1774 = vadd.f32 %v1773, 1e-05
          %v1775 = vrsqrt.pop %v1774
          %v1776 = vmul.f32 %v1768, %v1775
          %v1777 = vmul.f32 %v1776, %v1761
          %v1778 = vadd.f32 %v1777, %v1762
          %v1779 = vld [vmem:[%s14] sm:$0xff]
          %v1780 = vld [vmem:[%s14 + $0x8] sm:$0xff]
          %v1781 = vld [vmem:[%s14 + $0x10] sm:$0xff]
          %v1782 = vld [vmem:[%s14 + $0x18] sm:$0xff]
          %v1783 = vld [vmem:[%s15] sm:$0x1]
          %v1785 = vsel %vm723, %v1778, 0
          %1787 = vmatprep.subr.mxu0 0.0
          %1788 = vmatpush1.msra.mxu0 0.0
          %1789 = vmatprep.subr.mxu0 0.0
          %1790 = vmatpush1.msra.mxu0 0.0
          %1791 = vmatprep.subr.mxu0 0.0
          %1792 = vmatpush1.msra.mxu0 0.0
          %1793 = vmatprep.subr.mxu0 0.0
          %1794 = vmatpush1.msra.mxu0 0.0
          %1795 = vmatprep.subr.mxu0 0.0
          %1796 = vmatpush1.msra.mxu0 0.0
          %1797 = vmatprep.subr.mxu0 0.0
          %1798 = vmatpush1.msra.mxu0 0.0
          %1799 = vmatprep.subr.mxu0 0.0
          %1800 = vmatpush1.msra.mxu0 0.0
          %1801 = vmatprep.subr.mxu0 0.0
          %1802 = vmatpush1.msra.mxu0 0.0
          %1803 = vmatprep.subr.mxu0 0.0
          %1804 = vmatpush1.msra.mxu0 0.0
          %1805 = vmatprep.subr.mxu0 0.0
          %1806 = vmatpush1.msra.mxu0 0.0
          %1807 = vmatprep.subr.mxu0 0.0
          %1808 = vmatpush1.msra.mxu0 0.0
          %1809 = vmatprep.subr.mxu0 0.0
          %1810 = vmatpush1.msra.mxu0 0.0
          %1811 = vmatprep.subr.mxu0 0.0
          %1812 = vmatpush1.msra.mxu0 %v1782
          %1813 = vmatprep.subr.mxu0 0.0
          %1814 = vmatpush1.msra.mxu0 %v1781
          %1815 = vmatprep.subr.mxu0 0.0
          %1816 = vmatpush1.msra.mxu0 %v1780
          %1817 = vmatprep.subr.mxu0 0.0
          %1818 = vmatpush1.msra.mxu0 %v1779
          %1819 = vmatprep.subr.mxu0 0.0
          %1820 = vmatpush2.msra.mxu0 0.0
          %1821 = vmatprep.subr.mxu0 0.0
          %1822 = vmatpush2.msra.mxu0 0.0
          %1823 = vmatprep.subr.mxu0 0.0
          %1824 = vmatpush2.msra.mxu0 0.0
          %1825 = vmatprep.subr.mxu0 0.0
          %1826 = vmatpush2.msra.mxu0 0.0
          %1827 = vmatprep.subr.mxu0 0.0
          %1828 = vmatpush2.msra.mxu0 0.0
          %1829 = vmatprep.subr.mxu0 0.0
          %1830 = vmatpush2.msra.mxu0 0.0
          %1831 = vmatprep.subr.mxu0 0.0
          %1832 = vmatpush2.msra.mxu0 0.0
          %1833 = vmatprep.subr.mxu0 0.0
          %1834 = vmatpush2.msra.mxu0 0.0
          %1835 = vmatprep.subr.mxu0 0.0
          %1836 = vmatpush2.msra.mxu0 0.0
          %1837 = vmatprep.subr.mxu0 0.0
          %1838 = vmatpush2.msra.mxu0 0.0
          %1839 = vmatprep.subr.mxu0 0.0
          %1840 = vmatpush2.msra.mxu0 0.0
          %1841 = vmatprep.subr.mxu0 0.0
          %1842 = vmatpush2.msra.mxu0 0.0
          %1843 = vmatprep.subr.mxu0 0.0
          %1844 = vmatpush2.msra.mxu0 0.0
          %1845 = vmatprep.subr.mxu0 0.0
          %1846 = vmatpush2.msra.mxu0 0.0
          %1847 = vmatprep.subr.mxu0 0.0
          %1848 = vmatpush2.msra.mxu0 0.0
          %1849 = vmatprep.subr.mxu0 0.0
          %1850 = vmatpush2.msra.mxu0 0.0
          %1851 = vmatprep.mubr.f32.mxu0 0.0
          %1852 = vmatmul.mubr.f32.gmra.mxu0 %v1785
          %v1853 = vpop.f32.mrf.mxu0
          %v1854 = vadd.f32 %v1783, %v1853
          %v1855 = vpop.f32.mrf.mxu0
          %1856 = vdwg.mxu0
          %vm1857 = vcmask 73728
          %1858 = vst.msk [vmem:[%s662] sm:$0x1] %vm1857, %v1854
        $region92: #{transformer_classifier.1} parent=83 // pred_fallthru
          _
        %s1859 = sand.u32 %s446, 1
        %s1860 = scalar_lea.sflag [#allocation4], %s1859
        %s1861 = sand.u32 %s446, 1
        %s1862 = scalar_lea.vmem [#allocation3], %s1861
        // Predicated region
        $region93: #{transformer_classifier.1} parent=83 // pred_check
          %p1863 = pneg %p456
        $region94: #{transformer_classifier.1} parent=83 // pred_check_branch
          %1865 = sbr.rel (%p1863) target = $region96
        $region95: #{transformer_classifier.1} parent=83 // pred_region
          %s1867 = ssub.s32 16, 16
          %1868 = vsyncadd %s1860, %s1867
          %s1869 = smul.addr %s34, 16
          %s1870 = scalar_lea.hbm %s16, %s1869
          %s1872 = sshll.u32 %s1862, 4
          %s1873 = int_to_ptr.vmem [resolvable:$true] %s1872
          %1875 = dma.vmem_to_hbm [thread:$0]  %s1873, 16, %s1870, %s1860
        $region96: #{transformer_classifier.1} parent=83 // pred_fallthru
          _
      $region84: #{transformer_classifier.1} parent=5 // pred_fallthru
        _
      %p1876 = scmp.le.s32.totalorder 2, %s25
      // Predicated region
      $region97: #{transformer_classifier.1} parent=5 // pred_check
        %p1877 = pneg %p1876
      $region98: #{transformer_classifier.1} parent=5 // pred_check_branch
        %1879 = sbr.rel (%p1877) target = $region100
      $region99: #{transformer_classifier.1} parent=5 // pred_region
        %s1880 = ssub.s32 %s25, 2
        // Predicated region
        $region101: #{transformer_classifier.1} parent=99 // pred_check
          %p1881 = pneg %p462
        $region102: #{transformer_classifier.1} parent=99 // pred_check_branch
          %1883 = sbr.rel (%p1881) target = $region104
        $region103: #{transformer_classifier.1} parent=99 // pred_region
          %s1884 = sand.u32 %s447, 1
          %s1885 = scalar_lea.sflag [#allocation4], %s1884
          %s1886 = sand.u32 %s447, 1
          %s1887 = scalar_lea.vmem [#allocation3], %s1886
          %1888 = dma.done %s1885, 16
        $region104: #{transformer_classifier.1} parent=99 // pred_fallthru
          _
      $region100: #{transformer_classifier.1} parent=5 // pred_fallthru
        _
    $region6: #{transformer_classifier.1} parent=1 // loop_footer
      %s29 = sadd.s32 1, %s25
    $region7: #{transformer_classifier.1} parent=1 // loop_footer_branch
      %24 = sbr.rel target = $region3
    $region8: #{transformer_classifier.1} parent=1 // loop_exit
      _
    %1889 = vsyncpa [#allocation4], 1
    %s1890 = scalar_lea.sflag [#allocation4], 1
    %1891 = vsyncpa %s1890, 1

</llo_original>
